<compile_context>
chip_gen: v5e
topology: v5e:2x2
jax: 0.10.0
libtpu: 0.0.40
codegen_flags: <defaults>
</compile_context>

<pallas_src>
import functools

import jax
import jax.numpy as jnp
from jax.experimental import pallas as pl
from jax.experimental.pallas import tpu as pltpu  # noqa: F401  (TPU backend)


# --------------------------------------------------------------------------
# exact GELU (erf) built from Pallas-lowerable ops (A&S 7.1.26, |err| < 1.5e-7)
# --------------------------------------------------------------------------
def _erf(z):
    a1, a2, a3, a4, a5 = (0.254829592, -0.284496736, 1.421413741,
                          -1.453152027, 1.061405429)
    pc = 0.3275911
    sgn = jnp.where(z >= 0.0, 1.0, -1.0)
    za = jnp.abs(z)
    t = 1.0 / (1.0 + pc * za)
    poly = ((((a5 * t + a4) * t + a3) * t + a2) * t + a1) * t
    return sgn * (1.0 - poly * jnp.exp(-za * za))


def _gelu_exact(x):
    return 0.5 * x * (1.0 + _erf(x * 0.7071067811865476))


# ------------------------------ fused kernel -------------------------------
def _multimodel_kernel(patch_in_ref, patch_w_ref, add_ref, ln_ref,
                       wqkv_ref, bqkv_ref, wo_ref, bo_ref,
                       wm1_ref, bm1_ref, wm2_ref, bm2_ref,
                       bias_ref, hmask_ref,
                       hw1_ref, hb1_ref, hw2_ref, hb2_ref,
                       hw3_ref, hb3_ref, hw4_ref, hb4_ref,
                       out_ref, *, B, S_pad, D, H, L, eps_ln):
    """Entire forward in one invocation (no grid).  M = B*S_pad rows."""
    M = B * S_pad
    bf16 = jnp.bfloat16

    def layer_norm(t, g, b):
        mu = jnp.mean(t, axis=-1, keepdims=True)
        var = jnp.mean(jnp.square(t - mu), axis=-1, keepdims=True)
        return (t - mu) * jax.lax.rsqrt(var + eps_ln) * g + b

    # ---- patch embedding + CLS + position embeddings (one MXU push) ----
    # patch_in has zero rows at CLS/pad positions; add_ref carries
    # (cls + pos[0]) on CLS rows, (patch_b + pos[i]) on patch rows, 0 on pads.
    x = (jnp.dot(patch_in_ref[...], patch_w_ref[...],
                 preferred_element_type=jnp.float32) + add_ref[...])        # (M, D)

    bias = bias_ref[...]                  # (M, H*M)  0 / -1e30 additive score mask
    hmask_f32 = hmask_ref[...]            # (H*M, D)  block-diagonal head selector
    hmask_bf16 = hmask_f32.astype(bf16)

    for l in range(L):                    # static unroll (L == 2)
        lnp = ln_ref[l]                   # (4, D): ln1_g, ln1_b, ln2_g, ln2_b

        # ---- attention: LN1 -> fused QKV -> block-diag SDPA -> proj -> +res
        xn = layer_norm(x, lnp[0:1, :], lnp[1:2, :])
        qkv = (jnp.dot(xn.astype(bf16), wqkv_ref[l],
                       preferred_element_type=jnp.float32) + bqkv_ref[l])   # (M, 3D)
        q = qkv[:, :D]
        k = qkv[:, D:2 * D]
        v = qkv[:, 2 * D:3 * D]

        # Block-diagonal key/value slabs: row h*M + j holds token j masked to the
        # lanes of head h, so ONE matmul yields all heads' scores and ONE matmul
        # yields all heads' contexts (no per-head lane slicing, no head loop).
        k_bd = (jnp.concatenate([k] * H, axis=0) * hmask_f32).astype(bf16)  # (H*M, D)
        v_bd = (jnp.concatenate([v] * H, axis=0) * hmask_f32).astype(bf16)  # (H*M, D)

        # scores[i, h*M + j] = <q_i, k_j>_{head h}   (1/sqrt(dh) folded into wq)
        s = jax.lax.dot_general(q.astype(bf16), k_bd,
                                (((1,), (1,)), ((), ())),
                                preferred_element_type=jnp.float32) + bias  # (M, H*M)
        s = s - jnp.max(s, axis=-1, keepdims=True)     # row max (shift-invariant)
        p = jnp.exp(s).astype(bf16)                    # masked entries -> exactly 0

        ctx_un = jnp.dot(p, v_bd, preferred_element_type=jnp.float32)       # (M, D)
        # per-(row, head) softmax denominator, broadcast across that head's lanes
        denom = jnp.dot(p, hmask_bf16, preferred_element_type=jnp.float32)  # (M, D)
        ctx = ctx_un * pl.reciprocal(denom, approx=True)

        x = x + jnp.dot(ctx.astype(bf16), wo_ref[l],
                        preferred_element_type=jnp.float32) + bo_ref[l]

        # ---- MLP: LN2 -> up -> exact GELU -> down -> +residual ----
        xn2 = layer_norm(x, lnp[2:3, :], lnp[3:4, :])
        hmid = (jnp.dot(xn2.astype(bf16), wm1_ref[l],
                        preferred_element_type=jnp.float32) + bm1_ref[l])
        hmid = _gelu_exact(hmid)
        x = x + jnp.dot(hmid.astype(bf16), wm2_ref[l],
                        preferred_element_type=jnp.float32) + bm2_ref[l]

    # ---- classification head (eval BatchNorm pre-folded, dropout == id) ----
    feat = x.reshape(B, S_pad, D)[:, 0:1, :].reshape(B, D)   # CLS rows, one slice
    y = jnp.maximum(jnp.dot(feat.astype(bf16), hw1_ref[...],
                            preferred_element_type=jnp.float32) + hb1_ref[...], 0.0)
    y = jnp.maximum(jnp.dot(y.astype(bf16), hw2_ref[...],
                            preferred_element_type=jnp.float32) + hb2_ref[...], 0.0)
    y = jnp.maximum(jnp.dot(y.astype(bf16), hw3_ref[...],
                            preferred_element_type=jnp.float32) + hb3_ref[...], 0.0)
    logits = jnp.dot(y.astype(bf16), hw4_ref[...],
                     preferred_element_type=jnp.float32) + hb4_ref[...]
    out_ref[...] = logits.astype(out_ref.dtype)


# ----------------------------- model definition -----------------------------
CFG = dict(
    batch=2, channels=3, image=16, patch=8,     # 2x2 = 4 patches, S = 5 tokens
    hidden=64, heads=4, layers=2, mlp=128,      # small synthetic ViT config
    head_dims=(256, 128, 64), num_classes=2,    # fixed by the PyTorch module
)


def init_params(key, cfg):
    D, C, p = cfg["hidden"], cfg["channels"], cfg["patch"]
    n_patches = (cfg["image"] // p) ** 2
    S = n_patches + 1
    mlp = cfg["mlp"]
    std = 0.1
    keys = iter(jax.random.split(key, 128))

    def w(shape, s=std):
        return (s * jax.random.normal(next(keys), shape)).astype(jnp.float32)

    params = {
        "patch_w": w((C * p * p, D)), "patch_b": w((1, D), 0.02),
        "cls": w((1, 1, D)), "pos": w((1, S, D)),
        "layers": [],
    }
    for _ in range(cfg["layers"]):
        params["layers"].append(dict(
            ln1_g=1.0 + w((1, D), 0.05), ln1_b=w((1, D), 0.05),
            wq=w((D, D)), bq=w((1, D), 0.02),
            wk=w((D, D)), bk=w((1, D), 0.02),
            wv=w((D, D)), bv=w((1, D), 0.02),
            wo=w((D, D)), bo=w((1, D), 0.02),
            ln2_g=1.0 + w((1, D), 0.05), ln2_b=w((1, D), 0.05),
            w_mlp1=w((D, mlp)), b_mlp1=w((1, mlp), 0.02),
            w_mlp2=w((mlp, D)), b_mlp2=w((1, D), 0.02),
        ))
    d1, d2, d3 = cfg["head_dims"]
    nc = cfg["num_classes"]

    def bn(n):   # non-trivial running stats so the eval-mode folding is exercised
        return dict(gamma=1.0 + w((1, n), 0.1), beta=w((1, n), 0.1),
                    mean=w((1, n), 0.1),
                    var=jax.random.uniform(next(keys), (1, n),
                                           minval=0.5, maxval=1.5))

    params.update(
        fc1_w=w((D, d1)), fc1_b=w((1, d1), 0.02),
        fc2_w=w((d1, d2)), fc2_b=w((1, d2), 0.02),
        fc3_w=w((d2, d3)), fc3_b=w((1, d3), 0.02),
        fc4_w=w((d3, nc)), fc4_b=w((1, nc), 0.02),
        bn1=bn(d1), bn2=bn(d2), bn3=bn(d3),
    )
    return params


def multimodel_forward(params, pixel_values, cfg):
    B, C, Himg, Wimg = pixel_values.shape
    p = cfg["patch"]
    D, H, L, mlp, nc = (cfg["hidden"], cfg["heads"], cfg["layers"],
                        cfg["mlp"], cfg["num_classes"])
    dh = D // H
    gh, gw = Himg // p, Wimg // p
    n_patches = gh * gw
    S = n_patches + 1
    S_pad = max(8, ((S + 7) // 8) * 8)          # sublane-aligned token count
    M = B * S_pad
    Mk = H * M
    Cpp = C * p * p
    scale = 1.0 / float(dh) ** 0.5
    bf16 = jnp.bfloat16

    # ---- layout plumbing (pure JAX, one-time, no compute hoisted) ----
    # Conv2d(kernel=stride=patch) == patch-flatten matmul, patch vector (c, i, j).
    patches = (pixel_values.reshape(B, C, gh, p, gw, p)
               .transpose(0, 2, 4, 1, 3, 5)
               .reshape(B, n_patches, Cpp))
    patch_in = jnp.concatenate(
        [jnp.zeros((B, 1, Cpp), jnp.float32),
         patches,
         jnp.zeros((B, S_pad - S, Cpp), jnp.float32)], axis=1).reshape(M, Cpp)
    add_row = jnp.concatenate(
        [params["cls"][0] + params["pos"][0, :1],
         jnp.broadcast_to(params["patch_b"], (n_patches, D)) + params["pos"][0, 1:S],
         jnp.zeros((S_pad - S, D), jnp.float32)], axis=0)               # (S_pad, D)
    add_slab = jnp.broadcast_to(add_row[None], (B, S_pad, D)).reshape(M, D)

    # ---- per-layer weights stacked on a leading layer axis (bf16 MXU operands) --
    lyrs = params["layers"]
    ln = jnp.stack([jnp.concatenate([l["ln1_g"], l["ln1_b"], l["ln2_g"], l["ln2_b"]],
                                    axis=0) for l in lyrs])             # (L, 4, D)
    # 1/sqrt(dh) folded into the Q projection (weights AND bias).
    wqkv = jnp.stack([jnp.concatenate([l["wq"] * scale, l["wk"], l["wv"]], axis=1)
                      for l in lyrs]).astype(bf16)                      # (L, D, 3D)
    bqkv = jnp.stack([jnp.concatenate([l["bq"] * scale, l["bk"], l["bv"]], axis=1)
                      for l in lyrs])                                   # (L, 1, 3D)
    wo = jnp.stack([l["wo"] for l in lyrs]).astype(bf16)
    bo = jnp.stack([l["bo"] for l in lyrs])
    wm1 = jnp.stack([l["w_mlp1"] for l in lyrs]).astype(bf16)
    bm1 = jnp.stack([l["b_mlp1"] for l in lyrs])
    wm2 = jnp.stack([l["w_mlp2"] for l in lyrs]).astype(bf16)
    bm2 = jnp.stack([l["b_mlp2"] for l in lyrs])

    # ---- attention constants (precomputed once, replace in-kernel iota/where) ----
    col = jnp.arange(Mk)
    key_row = col % M
    key_ok = (key_row % S_pad) < S                               # real token?
    same_batch = (key_row // S_pad)[None, :] == (jnp.arange(M) // S_pad)[:, None]
    attn_bias = jnp.where(same_batch & key_ok[None, :], 0.0, -1e30
                          ).astype(jnp.float32)                  # (M, H*M)
    head_mask = ((col // M)[:, None] == (jnp.arange(D) // dh)[None, :]
                 ).astype(jnp.float32)                           # (H*M, D)

    # ---- fold eval-mode BatchNorm into the head linears at trace time ----
    def fold_bn(w_, b_, bn, eps=1e-5):
        s = bn["gamma"] * jax.lax.rsqrt(bn["var"] + eps)
        return (w_ * s).astype(bf16), (b_ - bn["mean"]) * s + bn["beta"]

    hw1, hb1 = fold_bn(params["fc1_w"], params["fc1_b"], params["bn1"])
    hw2, hb2 = fold_bn(params["fc2_w"], params["fc2_b"], params["bn2"])
    hw3, hb3 = fold_bn(params["fc3_w"], params["fc3_b"], params["bn3"])
    hw4, hb4 = params["fc4_w"].astype(bf16), params["fc4_b"]

    kernel = functools.partial(_multimodel_kernel,
                               B=B, S_pad=S_pad, D=D, H=H, L=L, eps_ln=1e-12)

    # Gridless single invocation: all operands (< 1 MiB total) land in VMEM via
    # the default whole-array BlockSpecs; no grid-step / predicate overhead.
    return pl.pallas_call(
        kernel,
        out_shape=jax.ShapeDtypeStruct((B, nc), jnp.float32),
    )(patch_in.astype(bf16), params["patch_w"].astype(bf16), add_slab,
      ln, wqkv, bqkv, wo, bo, wm1, bm1, wm2, bm2,
      attn_bias, head_mask,
      hw1, hb1, hw2, hb2, hw3, hb3, hw4, hb4)


# --------------------------- pure-JAX f32 reference --------------------------
def reference_forward(params, pixel_values, cfg):
    B, C, Himg, Wimg = pixel_values.shape
    p, D, H = cfg["patch"], cfg["hidden"], cfg["heads"]
    dh = D // H
    gh, gw = Himg // p, Wimg // p
    patches = (pixel_values.reshape(B, C, gh, p, gw, p)
               .transpose(0, 2, 4, 1, 3, 5).reshape(B, gh * gw, C * p * p))
    x = patches @ params["patch_w"] + params["patch_b"]
    x = jnp.concatenate([jnp.broadcast_to(params["cls"], (B, 1, D)), x], axis=1)
    x = x + params["pos"]

    def ln(t, g, b, eps=1e-12):
        mu = t.mean(-1, keepdims=True)
        var = ((t - mu) ** 2).mean(-1, keepdims=True)
        return (t - mu) / jnp.sqrt(var + eps) * g + b

    for lyr in params["layers"]:
        xn = ln(x, lyr["ln1_g"], lyr["ln1_b"])
        q = xn @ lyr["wq"] + lyr["bq"]
        k = xn @ lyr["wk"] + lyr["bk"]
        v = xn @ lyr["wv"] + lyr["bv"]
        heads = lambda t: t.reshape(B, -1, H, dh).transpose(0, 2, 1, 3)
        qh, kh, vh = heads(q), heads(k), heads(v)
        s = jnp.einsum("bhqd,bhkd->bhqk", qh, kh) / jnp.sqrt(float(dh))
        a = jax.nn.softmax(s, axis=-1)
        ctx = jnp.einsum("bhqk,bhkd->bhqd", a, vh).transpose(0, 2, 1, 3)
        ctx = ctx.reshape(B, -1, D)
        x = x + ctx @ lyr["wo"] + lyr["bo"]
        xn2 = ln(x, lyr["ln2_g"], lyr["ln2_b"])
        hmid = jax.nn.gelu(xn2 @ lyr["w_mlp1"] + lyr["b_mlp1"], approximate=False)
        x = x + hmid @ lyr["w_mlp2"] + lyr["b_mlp2"]

    feat = x[:, 0, :]

    def bn(t, st, eps=1e-5):
        return (t - st["mean"]) / jnp.sqrt(st["var"] + eps) * st["gamma"] + st["beta"]

    y = jax.nn.relu(bn(feat @ params["fc1_w"] + params["fc1_b"], params["bn1"]))
    y = jax.nn.relu(bn(y @ params["fc2_w"] + params["fc2_b"], params["bn2"]))
    y = jax.nn.relu(bn(y @ params["fc3_w"] + params["fc3_b"], params["bn3"]))
    return y @ params["fc4_w"] + params["fc4_b"]


# ----------------------------------- main -----------------------------------
if __name__ == "__main__":
    key = jax.random.PRNGKey(0)
    pkey, xkey = jax.random.split(key)
    params = init_params(pkey, CFG)
    pixel_values = jax.random.normal(
        xkey, (CFG["batch"], CFG["channels"], CFG["image"], CFG["image"]),
        jnp.float32)

    fwd = jax.jit(functools.partial(multimodel_forward, cfg=CFG))
    logits = fwd(params, pixel_values)
    jax.block_until_ready(logits)
    assert logits.shape == (CFG["batch"], CFG["num_classes"])
    assert bool(jnp.all(jnp.isfinite(logits)))

    # sanity check vs. a pure-JAX f32 reference (loose tolerance: bf16 MXU
    # operands + approximate EUP reciprocal in the fused kernel)
    ref = reference_forward(params, pixel_values, CFG)
    max_err = float(jnp.max(jnp.abs(logits - ref)))
    assert jnp.allclose(logits, ref, rtol=1e-1, atol=1e-1), (
        "mismatch vs reference, max|diff|=%g" % max_err)

    print("KERNEL_OK")
</pallas_src>

<mosaic_0001>
module attributes {stable_mosaic.version = 11 : i64} {
  func.func @_multimodel_kernel(%arg0: memref<16x192xbf16, #tpu.memory_space<vmem>>, %arg1: memref<192x64xbf16, #tpu.memory_space<vmem>>, %arg2: memref<16x64xf32, #tpu.memory_space<vmem>>, %arg3: memref<2x4x64xf32, #tpu.memory_space<vmem>>, %arg4: memref<2x64x192xbf16, #tpu.memory_space<vmem>>, %arg5: memref<2x1x192xf32, #tpu.memory_space<vmem>>, %arg6: memref<2x64x64xbf16, #tpu.memory_space<vmem>>, %arg7: memref<2x1x64xf32, #tpu.memory_space<vmem>>, %arg8: memref<2x64x128xbf16, #tpu.memory_space<vmem>>, %arg9: memref<2x1x128xf32, #tpu.memory_space<vmem>>, %arg10: memref<2x128x64xbf16, #tpu.memory_space<vmem>>, %arg11: memref<2x1x64xf32, #tpu.memory_space<vmem>>, %arg12: memref<16x64xf32, #tpu.memory_space<vmem>>, %arg13: memref<64x64xf32, #tpu.memory_space<vmem>>, %arg14: memref<64x256xbf16, #tpu.memory_space<vmem>>, %arg15: memref<1x256xf32, #tpu.memory_space<vmem>>, %arg16: memref<256x128xbf16, #tpu.memory_space<vmem>>, %arg17: memref<1x128xf32, #tpu.memory_space<vmem>>, %arg18: memref<128x64xbf16, #tpu.memory_space<vmem>>, %arg19: memref<1x64xf32, #tpu.memory_space<vmem>>, %arg20: memref<64x2xbf16, #tpu.memory_space<vmem>>, %arg21: memref<1x2xf32, #tpu.memory_space<vmem>>, %arg22: memref<2x2xf32, #tpu.memory_space<vmem>>) attributes {dimension_semantics = [], scalar_prefetch = 0 : i64, scratch_operands = 0 : i64, tpu.core_type = #tpu.core_type<tc>} {
    %c0 = arith.constant 0 : index
    %c0_0 = arith.constant 0 : index
    %0 = vector.load %arg0[%c0, %c0_0] : memref<16x192xbf16, #tpu.memory_space<vmem>>, vector<16x192xbf16>
    %c0_1 = arith.constant 0 : index
    %c0_2 = arith.constant 0 : index
    %1 = vector.load %arg1[%c0_1, %c0_2] : memref<192x64xbf16, #tpu.memory_space<vmem>>, vector<192x64xbf16>
    %cst = arith.constant dense<0.000000e+00> : vector<16x64xf32>
    %2 = tpu.matmul %0, %1, %cst {dimension_numbers = #tpu.dot_dimension_numbers<[1], [0], [0], [1], [0, 0, 1, 1], [], []>} : vector<16x192xbf16>, vector<192x64xbf16>, vector<16x64xf32> -> vector<16x64xf32>
    %c0_3 = arith.constant 0 : index
    %c0_4 = arith.constant 0 : index
    %3 = vector.load %arg2[%c0_3, %c0_4] : memref<16x64xf32, #tpu.memory_space<vmem>>, vector<16x64xf32>
    %4 = arith.addf %2, %3 : vector<16x64xf32>
    %c0_5 = arith.constant 0 : index
    %c0_6 = arith.constant 0 : index
    %5 = vector.load %arg12[%c0_5, %c0_6] : memref<16x64xf32, #tpu.memory_space<vmem>>, vector<16x64xf32>
    %c0_7 = arith.constant 0 : index
    %c0_8 = arith.constant 0 : index
    %6 = vector.load %arg13[%c0_7, %c0_8] : memref<64x64xf32, #tpu.memory_space<vmem>>, vector<64x64xf32>
    %7 = arith.truncf %6 : vector<64x64xf32> to vector<64x64xbf16>
    %c0_9 = arith.constant 0 : index
    %c0_10 = arith.constant 0 : index
    %c0_11 = arith.constant 0 : index
    %8 = vector.load %arg3[%c0_9, %c0_10, %c0_11] : memref<2x4x64xf32, #tpu.memory_space<vmem>>, vector<1x4x64xf32>
    %9 = vector.shape_cast %8 : vector<1x4x64xf32> to vector<4x64xf32>
    %10 = vector.extract_strided_slice %9 {offsets = [0, 0], sizes = [1, 64], strides = [1, 1]} : vector<4x64xf32> to vector<1x64xf32>
    %11 = vector.extract_strided_slice %9 {offsets = [1, 0], sizes = [1, 64], strides = [1, 1]} : vector<4x64xf32> to vector<1x64xf32>
    %cst_12 = arith.constant dense<0.000000e+00> : vector<16xf32>
    %12 = vector.multi_reduction <add>, %4, %cst_12 [1] : vector<16x64xf32> to vector<16xf32>
    %13 = vector.shape_cast %12 : vector<16xf32> to vector<16x1xf32>
    %cst_13 = arith.constant 6.400000e+01 : f32
    %14 = vector.broadcast %cst_13 : f32 to vector<16x1xf32>
    %15 = arith.divf %13, %14 : vector<16x1xf32>
    %16 = vector.broadcast %15 : vector<16x1xf32> to vector<16x64xf32>
    %17 = arith.subf %4, %16 : vector<16x64xf32>
    %18 = arith.mulf %17, %17 : vector<16x64xf32>
    %cst_14 = arith.constant dense<0.000000e+00> : vector<16xf32>
    %19 = vector.multi_reduction <add>, %18, %cst_14 [1] : vector<16x64xf32> to vector<16xf32>
    %20 = vector.shape_cast %19 : vector<16xf32> to vector<16x1xf32>
    %cst_15 = arith.constant 6.400000e+01 : f32
    %21 = vector.broadcast %cst_15 : f32 to vector<16x1xf32>
    %22 = arith.divf %20, %21 : vector<16x1xf32>
    %23 = vector.broadcast %15 : vector<16x1xf32> to vector<16x64xf32>
    %24 = arith.subf %4, %23 : vector<16x64xf32>
    %cst_16 = arith.constant 9.99999996E-13 : f32
    %25 = vector.broadcast %cst_16 : f32 to vector<16x1xf32>
    %26 = arith.addf %22, %25 : vector<16x1xf32>
    %27 = math.rsqrt %26 : vector<16x1xf32>
    %28 = vector.broadcast %27 : vector<16x1xf32> to vector<16x64xf32>
    %29 = arith.mulf %24, %28 : vector<16x64xf32>
    %30 = vector.broadcast %10 : vector<1x64xf32> to vector<16x64xf32>
    %31 = arith.mulf %29, %30 : vector<16x64xf32>
    %32 = vector.broadcast %11 : vector<1x64xf32> to vector<16x64xf32>
    %33 = arith.addf %31, %32 : vector<16x64xf32>
    %34 = arith.truncf %33 : vector<16x64xf32> to vector<16x64xbf16>
    %c0_17 = arith.constant 0 : index
    %c0_18 = arith.constant 0 : index
    %c0_19 = arith.constant 0 : index
    %35 = vector.load %arg4[%c0_17, %c0_18, %c0_19] : memref<2x64x192xbf16, #tpu.memory_space<vmem>>, vector<1x64x192xbf16>
    %36 = vector.shape_cast %35 : vector<1x64x192xbf16> to vector<64x192xbf16>
    %cst_20 = arith.constant dense<0.000000e+00> : vector<16x192xf32>
    %37 = tpu.matmul %34, %36, %cst_20 {dimension_numbers = #tpu.dot_dimension_numbers<[1], [0], [0], [1], [0, 0, 1, 1], [], []>} : vector<16x64xbf16>, vector<64x192xbf16>, vector<16x192xf32> -> vector<16x192xf32>
    %c0_21 = arith.constant 0 : index
    %c0_22 = arith.constant 0 : index
    %c0_23 = arith.constant 0 : index
    %38 = vector.load %arg5[%c0_21, %c0_22, %c0_23] : memref<2x1x192xf32, #tpu.memory_space<vmem>>, vector<1x1x192xf32>
    %39 = vector.shape_cast %38 : vector<1x1x192xf32> to vector<1x192xf32>
    %40 = vector.broadcast %39 : vector<1x192xf32> to vector<16x192xf32>
    %41 = arith.addf %37, %40 : vector<16x192xf32>
    %42 = vector.extract_strided_slice %41 {offsets = [0, 0], sizes = [16, 64], strides = [1, 1]} : vector<16x192xf32> to vector<16x64xf32>
    %43 = vector.extract_strided_slice %41 {offsets = [0, 64], sizes = [16, 64], strides = [1, 1]} : vector<16x192xf32> to vector<16x64xf32>
    %44 = vector.extract_strided_slice %41 {offsets = [0, 128], sizes = [16, 64], strides = [1, 1]} : vector<16x192xf32> to vector<16x64xf32>
    %45 = tpu.concatenate %43, %43, %43, %43 in 0 : vector<16x64xf32>, vector<16x64xf32>, vector<16x64xf32>, vector<16x64xf32> -> vector<64x64xf32>
    %46 = arith.mulf %45, %6 : vector<64x64xf32>
    %47 = arith.truncf %46 : vector<64x64xf32> to vector<64x64xbf16>
    %48 = tpu.concatenate %44, %44, %44, %44 in 0 : vector<16x64xf32>, vector<16x64xf32>, vector<16x64xf32>, vector<16x64xf32> -> vector<64x64xf32>
    %49 = arith.mulf %48, %6 : vector<64x64xf32>
    %50 = arith.truncf %49 : vector<64x64xf32> to vector<64x64xbf16>
    %51 = arith.truncf %42 : vector<16x64xf32> to vector<16x64xbf16>
    %cst_24 = arith.constant dense<0.000000e+00> : vector<16x64xf32>
    %52 = tpu.matmul %51, %47, %cst_24 {dimension_numbers = #tpu.dot_dimension_numbers<[1], [1], [0], [0], [0, 0, 1, 0], [], []>} : vector<16x64xbf16>, vector<64x64xbf16>, vector<16x64xf32> -> vector<16x64xf32>
    %53 = arith.addf %52, %5 : vector<16x64xf32>
    %cst_25 = arith.constant dense<0xFF800000> : vector<16xf32>
    %54 = vector.multi_reduction <maximumf>, %53, %cst_25 [1] : vector<16x64xf32> to vector<16xf32>
    %55 = vector.shape_cast %54 : vector<16xf32> to vector<16x1xf32>
    %56 = vector.broadcast %55 : vector<16x1xf32> to vector<16x64xf32>
    %57 = arith.subf %53, %56 : vector<16x64xf32>
    %58 = math.exp %57 : vector<16x64xf32>
    %59 = arith.truncf %58 : vector<16x64xf32> to vector<16x64xbf16>
    %cst_26 = arith.constant dense<0.000000e+00> : vector<16x64xf32>
    %60 = tpu.matmul %59, %50, %cst_26 {dimension_numbers = #tpu.dot_dimension_numbers<[1], [0], [0], [1], [0, 0, 1, 1], [], []>} : vector<16x64xbf16>, vector<64x64xbf16>, vector<16x64xf32> -> vector<16x64xf32>
    %cst_27 = arith.constant dense<0.000000e+00> : vector<16x64xf32>
    %61 = tpu.matmul %59, %7, %cst_27 {dimension_numbers = #tpu.dot_dimension_numbers<[1], [0], [0], [1], [0, 0, 1, 1], [], []>} : vector<16x64xbf16>, vector<64x64xbf16>, vector<16x64xf32> -> vector<16x64xf32>
    %62 = tpu.reciprocal %61 {approx = true} : vector<16x64xf32> -> vector<16x64xf32>
    %63 = arith.mulf %60, %62 : vector<16x64xf32>
    %64 = arith.truncf %63 : vector<16x64xf32> to vector<16x64xbf16>
    %c0_28 = arith.constant 0 : index
    %c0_29 = arith.constant 0 : index
    %c0_30 = arith.constant 0 : index
    %65 = vector.load %arg6[%c0_28, %c0_29, %c0_30] : memref<2x64x64xbf16, #tpu.memory_space<vmem>>, vector<1x64x64xbf16>
    %66 = vector.shape_cast %65 : vector<1x64x64xbf16> to vector<64x64xbf16>
    %cst_31 = arith.constant dense<0.000000e+00> : vector<16x64xf32>
    %67 = tpu.matmul %64, %66, %cst_31 {dimension_numbers = #tpu.dot_dimension_numbers<[1], [0], [0], [1], [0, 0, 1, 1], [], []>} : vector<16x64xbf16>, vector<64x64xbf16>, vector<16x64xf32> -> vector<16x64xf32>
    %68 = arith.addf %4, %67 : vector<16x64xf32>
    %c0_32 = arith.constant 0 : index
    %c0_33 = arith.constant 0 : index
    %c0_34 = arith.constant 0 : index
    %69 = vector.load %arg7[%c0_32, %c0_33, %c0_34] : memref<2x1x64xf32, #tpu.memory_space<vmem>>, vector<1x1x64xf32>
    %70 = vector.shape_cast %69 : vector<1x1x64xf32> to vector<1x64xf32>
    %71 = vector.broadcast %70 : vector<1x64xf32> to vector<16x64xf32>
    %72 = arith.addf %68, %71 : vector<16x64xf32>
    %73 = vector.extract_strided_slice %9 {offsets = [2, 0], sizes = [1, 64], strides = [1, 1]} : vector<4x64xf32> to vector<1x64xf32>
    %74 = vector.extract_strided_slice %9 {offsets = [3, 0], sizes = [1, 64], strides = [1, 1]} : vector<4x64xf32> to vector<1x64xf32>
    %cst_35 = arith.constant dense<0.000000e+00> : vector<16xf32>
    %75 = vector.multi_reduction <add>, %72, %cst_35 [1] : vector<16x64xf32> to vector<16xf32>
    %76 = vector.shape_cast %75 : vector<16xf32> to vector<16x1xf32>
    %cst_36 = arith.constant 6.400000e+01 : f32
    %77 = vector.broadcast %cst_36 : f32 to vector<16x1xf32>
    %78 = arith.divf %76, %77 : vector<16x1xf32>
    %79 = vector.broadcast %78 : vector<16x1xf32> to vector<16x64xf32>
    %80 = arith.subf %72, %79 : vector<16x64xf32>
    %81 = arith.mulf %80, %80 : vector<16x64xf32>
    %cst_37 = arith.constant dense<0.000000e+00> : vector<16xf32>
    %82 = vector.multi_reduction <add>, %81, %cst_37 [1] : vector<16x64xf32> to vector<16xf32>
    %83 = vector.shape_cast %82 : vector<16xf32> to vector<16x1xf32>
    %cst_38 = arith.constant 6.400000e+01 : f32
    %84 = vector.broadcast %cst_38 : f32 to vector<16x1xf32>
    %85 = arith.divf %83, %84 : vector<16x1xf32>
    %86 = vector.broadcast %78 : vector<16x1xf32> to vector<16x64xf32>
    %87 = arith.subf %72, %86 : vector<16x64xf32>
    %cst_39 = arith.constant 9.99999996E-13 : f32
    %88 = vector.broadcast %cst_39 : f32 to vector<16x1xf32>
    %89 = arith.addf %85, %88 : vector<16x1xf32>
    %90 = math.rsqrt %89 : vector<16x1xf32>
    %91 = vector.broadcast %90 : vector<16x1xf32> to vector<16x64xf32>
    %92 = arith.mulf %87, %91 : vector<16x64xf32>
    %93 = vector.broadcast %73 : vector<1x64xf32> to vector<16x64xf32>
    %94 = arith.mulf %92, %93 : vector<16x64xf32>
    %95 = vector.broadcast %74 : vector<1x64xf32> to vector<16x64xf32>
    %96 = arith.addf %94, %95 : vector<16x64xf32>
    %97 = arith.truncf %96 : vector<16x64xf32> to vector<16x64xbf16>
    %c0_40 = arith.constant 0 : index
    %c0_41 = arith.constant 0 : index
    %c0_42 = arith.constant 0 : index
    %98 = vector.load %arg8[%c0_40, %c0_41, %c0_42] : memref<2x64x128xbf16, #tpu.memory_space<vmem>>, vector<1x64x128xbf16>
    %99 = vector.shape_cast %98 : vector<1x64x128xbf16> to vector<64x128xbf16>
    %cst_43 = arith.constant dense<0.000000e+00> : vector<16x128xf32>
    %100 = tpu.matmul %97, %99, %cst_43 {dimension_numbers = #tpu.dot_dimension_numbers<[1], [0], [0], [1], [0, 0, 1, 1], [], []>} : vector<16x64xbf16>, vector<64x128xbf16>, vector<16x128xf32> -> vector<16x128xf32>
    %c0_44 = arith.constant 0 : index
    %c0_45 = arith.constant 0 : index
    %c0_46 = arith.constant 0 : index
    %101 = vector.load %arg9[%c0_44, %c0_45, %c0_46] : memref<2x1x128xf32, #tpu.memory_space<vmem>>, vector<1x1x128xf32>
    %102 = vector.shape_cast %101 : vector<1x1x128xf32> to vector<1x128xf32>
    %103 = vector.broadcast %102 : vector<1x128xf32> to vector<16x128xf32>
    %104 = arith.addf %100, %103 : vector<16x128xf32>
    %cst_47 = arith.constant 5.000000e-01 : f32
    %105 = vector.broadcast %cst_47 : f32 to vector<16x128xf32>
    %106 = arith.mulf %105, %104 : vector<16x128xf32>
    %cst_48 = arith.constant 0.707106769 : f32
    %107 = vector.broadcast %cst_48 : f32 to vector<16x128xf32>
    %108 = arith.mulf %104, %107 : vector<16x128xf32>
    %cst_49 = arith.constant 0.000000e+00 : f32
    %109 = vector.broadcast %cst_49 : f32 to vector<16x128xf32>
    %110 = arith.cmpf oge, %108, %109 : vector<16x128xf32>
    %cst_50 = arith.constant 1.000000e+00 : f32
    %cst_51 = arith.constant -1.000000e+00 : f32
    %111 = vector.broadcast %cst_50 : f32 to vector<16x128xf32>
    %112 = vector.broadcast %cst_51 : f32 to vector<16x128xf32>
    %113 = arith.select %110, %111, %112 : vector<16x128xi1>, vector<16x128xf32>
    %114 = math.absf %108 : vector<16x128xf32>
    %cst_52 = arith.constant 0.327591091 : f32
    %115 = vector.broadcast %cst_52 : f32 to vector<16x128xf32>
    %116 = arith.mulf %115, %114 : vector<16x128xf32>
    %cst_53 = arith.constant 1.000000e+00 : f32
    %117 = vector.broadcast %cst_53 : f32 to vector<16x128xf32>
    %118 = arith.addf %117, %116 : vector<16x128xf32>
    %cst_54 = arith.constant 1.000000e+00 : f32
    %119 = vector.broadcast %cst_54 : f32 to vector<16x128xf32>
    %120 = arith.divf %119, %118 : vector<16x128xf32>
    %cst_55 = arith.constant 1.06140542 : f32
    %121 = vector.broadcast %cst_55 : f32 to vector<16x128xf32>
    %122 = arith.mulf %121, %120 : vector<16x128xf32>
    %cst_56 = arith.constant -1.45315206 : f32
    %123 = vector.broadcast %cst_56 : f32 to vector<16x128xf32>
    %124 = arith.addf %122, %123 : vector<16x128xf32>
    %125 = arith.mulf %124, %120 : vector<16x128xf32>
    %cst_57 = arith.constant 1.42141378 : f32
    %126 = vector.broadcast %cst_57 : f32 to vector<16x128xf32>
    %127 = arith.addf %125, %126 : vector<16x128xf32>
    %128 = arith.mulf %127, %120 : vector<16x128xf32>
    %cst_58 = arith.constant -0.284496725 : f32
    %129 = vector.broadcast %cst_58 : f32 to vector<16x128xf32>
    %130 = arith.addf %128, %129 : vector<16x128xf32>
    %131 = arith.mulf %130, %120 : vector<16x128xf32>
    %cst_59 = arith.constant 0.254829586 : f32
    %132 = vector.broadcast %cst_59 : f32 to vector<16x128xf32>
    %133 = arith.addf %131, %132 : vector<16x128xf32>
    %134 = arith.mulf %133, %120 : vector<16x128xf32>
    %cst_60 = arith.constant 0.000000e+00 : f32
    %135 = vector.broadcast %cst_60 : f32 to vector<16x128xf32>
    %136 = arith.subf %135, %114 : vector<16x128xf32>
    %137 = arith.mulf %136, %114 : vector<16x128xf32>
    %138 = math.exp %137 : vector<16x128xf32>
    %139 = arith.mulf %134, %138 : vector<16x128xf32>
    %cst_61 = arith.constant 1.000000e+00 : f32
    %140 = vector.broadcast %cst_61 : f32 to vector<16x128xf32>
    %141 = arith.subf %140, %139 : vector<16x128xf32>
    %142 = arith.mulf %113, %141 : vector<16x128xf32>
    %cst_62 = arith.constant 1.000000e+00 : f32
    %143 = vector.broadcast %cst_62 : f32 to vector<16x128xf32>
    %144 = arith.addf %143, %142 : vector<16x128xf32>
    %145 = arith.mulf %106, %144 : vector<16x128xf32>
    %146 = arith.truncf %145 : vector<16x128xf32> to vector<16x128xbf16>
    %c0_63 = arith.constant 0 : index
    %c0_64 = arith.constant 0 : index
    %c0_65 = arith.constant 0 : index
    %147 = vector.load %arg10[%c0_63, %c0_64, %c0_65] : memref<2x128x64xbf16, #tpu.memory_space<vmem>>, vector<1x128x64xbf16>
    %148 = vector.shape_cast %147 : vector<1x128x64xbf16> to vector<128x64xbf16>
    %cst_66 = arith.constant dense<0.000000e+00> : vector<16x64xf32>
    %149 = tpu.matmul %146, %148, %cst_66 {dimension_numbers = #tpu.dot_dimension_numbers<[1], [0], [0], [1], [0, 0, 1, 1], [], []>} : vector<16x128xbf16>, vector<128x64xbf16>, vector<16x64xf32> -> vector<16x64xf32>
    %150 = arith.addf %72, %149 : vector<16x64xf32>
    %c0_67 = arith.constant 0 : index
    %c0_68 = arith.constant 0 : index
    %c0_69 = arith.constant 0 : index
    %151 = vector.load %arg11[%c0_67, %c0_68, %c0_69] : memref<2x1x64xf32, #tpu.memory_space<vmem>>, vector<1x1x64xf32>
    %152 = vector.shape_cast %151 : vector<1x1x64xf32> to vector<1x64xf32>
    %153 = vector.broadcast %152 : vector<1x64xf32> to vector<16x64xf32>
    %154 = arith.addf %150, %153 : vector<16x64xf32>
    %c1 = arith.constant 1 : index
    %c0_70 = arith.constant 0 : index
    %c0_71 = arith.constant 0 : index
    %155 = vector.load %arg3[%c1, %c0_70, %c0_71] : memref<2x4x64xf32, #tpu.memory_space<vmem>>, vector<1x4x64xf32>
    %156 = vector.shape_cast %155 : vector<1x4x64xf32> to vector<4x64xf32>
    %157 = vector.extract_strided_slice %156 {offsets = [0, 0], sizes = [1, 64], strides = [1, 1]} : vector<4x64xf32> to vector<1x64xf32>
    %158 = vector.extract_strided_slice %156 {offsets = [1, 0], sizes = [1, 64], strides = [1, 1]} : vector<4x64xf32> to vector<1x64xf32>
    %cst_72 = arith.constant dense<0.000000e+00> : vector<16xf32>
    %159 = vector.multi_reduction <add>, %154, %cst_72 [1] : vector<16x64xf32> to vector<16xf32>
    %160 = vector.shape_cast %159 : vector<16xf32> to vector<16x1xf32>
    %cst_73 = arith.constant 6.400000e+01 : f32
    %161 = vector.broadcast %cst_73 : f32 to vector<16x1xf32>
    %162 = arith.divf %160, %161 : vector<16x1xf32>
    %163 = vector.broadcast %162 : vector<16x1xf32> to vector<16x64xf32>
    %164 = arith.subf %154, %163 : vector<16x64xf32>
    %165 = arith.mulf %164, %164 : vector<16x64xf32>
    %cst_74 = arith.constant dense<0.000000e+00> : vector<16xf32>
    %166 = vector.multi_reduction <add>, %165, %cst_74 [1] : vector<16x64xf32> to vector<16xf32>
    %167 = vector.shape_cast %166 : vector<16xf32> to vector<16x1xf32>
    %cst_75 = arith.constant 6.400000e+01 : f32
    %168 = vector.broadcast %cst_75 : f32 to vector<16x1xf32>
    %169 = arith.divf %167, %168 : vector<16x1xf32>
    %170 = vector.broadcast %162 : vector<16x1xf32> to vector<16x64xf32>
    %171 = arith.subf %154, %170 : vector<16x64xf32>
    %cst_76 = arith.constant 9.99999996E-13 : f32
    %172 = vector.broadcast %cst_76 : f32 to vector<16x1xf32>
    %173 = arith.addf %169, %172 : vector<16x1xf32>
    %174 = math.rsqrt %173 : vector<16x1xf32>
    %175 = vector.broadcast %174 : vector<16x1xf32> to vector<16x64xf32>
    %176 = arith.mulf %171, %175 : vector<16x64xf32>
    %177 = vector.broadcast %157 : vector<1x64xf32> to vector<16x64xf32>
    %178 = arith.mulf %176, %177 : vector<16x64xf32>
    %179 = vector.broadcast %158 : vector<1x64xf32> to vector<16x64xf32>
    %180 = arith.addf %178, %179 : vector<16x64xf32>
    %181 = arith.truncf %180 : vector<16x64xf32> to vector<16x64xbf16>
    %c1_77 = arith.constant 1 : index
    %c0_78 = arith.constant 0 : index
    %c0_79 = arith.constant 0 : index
    %182 = vector.load %arg4[%c1_77, %c0_78, %c0_79] : memref<2x64x192xbf16, #tpu.memory_space<vmem>>, vector<1x64x192xbf16>
    %183 = vector.shape_cast %182 : vector<1x64x192xbf16> to vector<64x192xbf16>
    %cst_80 = arith.constant dense<0.000000e+00> : vector<16x192xf32>
    %184 = tpu.matmul %181, %183, %cst_80 {dimension_numbers = #tpu.dot_dimension_numbers<[1], [0], [0], [1], [0, 0, 1, 1], [], []>} : vector<16x64xbf16>, vector<64x192xbf16>, vector<16x192xf32> -> vector<16x192xf32>
    %c1_81 = arith.constant 1 : index
    %c0_82 = arith.constant 0 : index
    %c0_83 = arith.constant 0 : index
    %185 = vector.load %arg5[%c1_81, %c0_82, %c0_83] : memref<2x1x192xf32, #tpu.memory_space<vmem>>, vector<1x1x192xf32>
    %186 = vector.shape_cast %185 : vector<1x1x192xf32> to vector<1x192xf32>
    %187 = vector.broadcast %186 : vector<1x192xf32> to vector<16x192xf32>
    %188 = arith.addf %184, %187 : vector<16x192xf32>
    %189 = vector.extract_strided_slice %188 {offsets = [0, 0], sizes = [16, 64], strides = [1, 1]} : vector<16x192xf32> to vector<16x64xf32>
    %190 = vector.extract_strided_slice %188 {offsets = [0, 64], sizes = [16, 64], strides = [1, 1]} : vector<16x192xf32> to vector<16x64xf32>
    %191 = vector.extract_strided_slice %188 {offsets = [0, 128], sizes = [16, 64], strides = [1, 1]} : vector<16x192xf32> to vector<16x64xf32>
    %192 = tpu.concatenate %190, %190, %190, %190 in 0 : vector<16x64xf32>, vector<16x64xf32>, vector<16x64xf32>, vector<16x64xf32> -> vector<64x64xf32>
    %193 = arith.mulf %192, %6 : vector<64x64xf32>
    %194 = arith.truncf %193 : vector<64x64xf32> to vector<64x64xbf16>
    %195 = tpu.concatenate %191, %191, %191, %191 in 0 : vector<16x64xf32>, vector<16x64xf32>, vector<16x64xf32>, vector<16x64xf32> -> vector<64x64xf32>
    %196 = arith.mulf %195, %6 : vector<64x64xf32>
    %197 = arith.truncf %196 : vector<64x64xf32> to vector<64x64xbf16>
    %198 = arith.truncf %189 : vector<16x64xf32> to vector<16x64xbf16>
    %cst_84 = arith.constant dense<0.000000e+00> : vector<16x64xf32>
    %199 = tpu.matmul %198, %194, %cst_84 {dimension_numbers = #tpu.dot_dimension_numbers<[1], [1], [0], [0], [0, 0, 1, 0], [], []>} : vector<16x64xbf16>, vector<64x64xbf16>, vector<16x64xf32> -> vector<16x64xf32>
    %200 = arith.addf %199, %5 : vector<16x64xf32>
    %cst_85 = arith.constant dense<0xFF800000> : vector<16xf32>
    %201 = vector.multi_reduction <maximumf>, %200, %cst_85 [1] : vector<16x64xf32> to vector<16xf32>
    %202 = vector.shape_cast %201 : vector<16xf32> to vector<16x1xf32>
    %203 = vector.broadcast %202 : vector<16x1xf32> to vector<16x64xf32>
    %204 = arith.subf %200, %203 : vector<16x64xf32>
    %205 = math.exp %204 : vector<16x64xf32>
    %206 = arith.truncf %205 : vector<16x64xf32> to vector<16x64xbf16>
    %cst_86 = arith.constant dense<0.000000e+00> : vector<16x64xf32>
    %207 = tpu.matmul %206, %197, %cst_86 {dimension_numbers = #tpu.dot_dimension_numbers<[1], [0], [0], [1], [0, 0, 1, 1], [], []>} : vector<16x64xbf16>, vector<64x64xbf16>, vector<16x64xf32> -> vector<16x64xf32>
    %cst_87 = arith.constant dense<0.000000e+00> : vector<16x64xf32>
    %208 = tpu.matmul %206, %7, %cst_87 {dimension_numbers = #tpu.dot_dimension_numbers<[1], [0], [0], [1], [0, 0, 1, 1], [], []>} : vector<16x64xbf16>, vector<64x64xbf16>, vector<16x64xf32> -> vector<16x64xf32>
    %209 = tpu.reciprocal %208 {approx = true} : vector<16x64xf32> -> vector<16x64xf32>
    %210 = arith.mulf %207, %209 : vector<16x64xf32>
    %211 = arith.truncf %210 : vector<16x64xf32> to vector<16x64xbf16>
    %c1_88 = arith.constant 1 : index
    %c0_89 = arith.constant 0 : index
    %c0_90 = arith.constant 0 : index
    %212 = vector.load %arg6[%c1_88, %c0_89, %c0_90] : memref<2x64x64xbf16, #tpu.memory_space<vmem>>, vector<1x64x64xbf16>
    %213 = vector.shape_cast %212 : vector<1x64x64xbf16> to vector<64x64xbf16>
    %cst_91 = arith.constant dense<0.000000e+00> : vector<16x64xf32>
    %214 = tpu.matmul %211, %213, %cst_91 {dimension_numbers = #tpu.dot_dimension_numbers<[1], [0], [0], [1], [0, 0, 1, 1], [], []>} : vector<16x64xbf16>, vector<64x64xbf16>, vector<16x64xf32> -> vector<16x64xf32>
    %215 = arith.addf %154, %214 : vector<16x64xf32>
    %c1_92 = arith.constant 1 : index
    %c0_93 = arith.constant 0 : index
    %c0_94 = arith.constant 0 : index
    %216 = vector.load %arg7[%c1_92, %c0_93, %c0_94] : memref<2x1x64xf32, #tpu.memory_space<vmem>>, vector<1x1x64xf32>
    %217 = vector.shape_cast %216 : vector<1x1x64xf32> to vector<1x64xf32>
    %218 = vector.broadcast %217 : vector<1x64xf32> to vector<16x64xf32>
    %219 = arith.addf %215, %218 : vector<16x64xf32>
    %220 = vector.extract_strided_slice %156 {offsets = [2, 0], sizes = [1, 64], strides = [1, 1]} : vector<4x64xf32> to vector<1x64xf32>
    %221 = vector.extract_strided_slice %156 {offsets = [3, 0], sizes = [1, 64], strides = [1, 1]} : vector<4x64xf32> to vector<1x64xf32>
    %cst_95 = arith.constant dense<0.000000e+00> : vector<16xf32>
    %222 = vector.multi_reduction <add>, %219, %cst_95 [1] : vector<16x64xf32> to vector<16xf32>
    %223 = vector.shape_cast %222 : vector<16xf32> to vector<16x1xf32>
    %cst_96 = arith.constant 6.400000e+01 : f32
    %224 = vector.broadcast %cst_96 : f32 to vector<16x1xf32>
    %225 = arith.divf %223, %224 : vector<16x1xf32>
    %226 = vector.broadcast %225 : vector<16x1xf32> to vector<16x64xf32>
    %227 = arith.subf %219, %226 : vector<16x64xf32>
    %228 = arith.mulf %227, %227 : vector<16x64xf32>
    %cst_97 = arith.constant dense<0.000000e+00> : vector<16xf32>
    %229 = vector.multi_reduction <add>, %228, %cst_97 [1] : vector<16x64xf32> to vector<16xf32>
    %230 = vector.shape_cast %229 : vector<16xf32> to vector<16x1xf32>
    %cst_98 = arith.constant 6.400000e+01 : f32
    %231 = vector.broadcast %cst_98 : f32 to vector<16x1xf32>
    %232 = arith.divf %230, %231 : vector<16x1xf32>
    %233 = vector.broadcast %225 : vector<16x1xf32> to vector<16x64xf32>
    %234 = arith.subf %219, %233 : vector<16x64xf32>
    %cst_99 = arith.constant 9.99999996E-13 : f32
    %235 = vector.broadcast %cst_99 : f32 to vector<16x1xf32>
    %236 = arith.addf %232, %235 : vector<16x1xf32>
    %237 = math.rsqrt %236 : vector<16x1xf32>
    %238 = vector.broadcast %237 : vector<16x1xf32> to vector<16x64xf32>
    %239 = arith.mulf %234, %238 : vector<16x64xf32>
    %240 = vector.broadcast %220 : vector<1x64xf32> to vector<16x64xf32>
    %241 = arith.mulf %239, %240 : vector<16x64xf32>
    %242 = vector.broadcast %221 : vector<1x64xf32> to vector<16x64xf32>
    %243 = arith.addf %241, %242 : vector<16x64xf32>
    %244 = arith.truncf %243 : vector<16x64xf32> to vector<16x64xbf16>
    %c1_100 = arith.constant 1 : index
    %c0_101 = arith.constant 0 : index
    %c0_102 = arith.constant 0 : index
    %245 = vector.load %arg8[%c1_100, %c0_101, %c0_102] : memref<2x64x128xbf16, #tpu.memory_space<vmem>>, vector<1x64x128xbf16>
    %246 = vector.shape_cast %245 : vector<1x64x128xbf16> to vector<64x128xbf16>
    %cst_103 = arith.constant dense<0.000000e+00> : vector<16x128xf32>
    %247 = tpu.matmul %244, %246, %cst_103 {dimension_numbers = #tpu.dot_dimension_numbers<[1], [0], [0], [1], [0, 0, 1, 1], [], []>} : vector<16x64xbf16>, vector<64x128xbf16>, vector<16x128xf32> -> vector<16x128xf32>
    %c1_104 = arith.constant 1 : index
    %c0_105 = arith.constant 0 : index
    %c0_106 = arith.constant 0 : index
    %248 = vector.load %arg9[%c1_104, %c0_105, %c0_106] : memref<2x1x128xf32, #tpu.memory_space<vmem>>, vector<1x1x128xf32>
    %249 = vector.shape_cast %248 : vector<1x1x128xf32> to vector<1x128xf32>
    %250 = vector.broadcast %249 : vector<1x128xf32> to vector<16x128xf32>
    %251 = arith.addf %247, %250 : vector<16x128xf32>
    %cst_107 = arith.constant 5.000000e-01 : f32
    %252 = vector.broadcast %cst_107 : f32 to vector<16x128xf32>
    %253 = arith.mulf %252, %251 : vector<16x128xf32>
    %cst_108 = arith.constant 0.707106769 : f32
    %254 = vector.broadcast %cst_108 : f32 to vector<16x128xf32>
    %255 = arith.mulf %251, %254 : vector<16x128xf32>
    %cst_109 = arith.constant 0.000000e+00 : f32
    %256 = vector.broadcast %cst_109 : f32 to vector<16x128xf32>
    %257 = arith.cmpf oge, %255, %256 : vector<16x128xf32>
    %cst_110 = arith.constant 1.000000e+00 : f32
    %cst_111 = arith.constant -1.000000e+00 : f32
    %258 = vector.broadcast %cst_110 : f32 to vector<16x128xf32>
    %259 = vector.broadcast %cst_111 : f32 to vector<16x128xf32>
    %260 = arith.select %257, %258, %259 : vector<16x128xi1>, vector<16x128xf32>
    %261 = math.absf %255 : vector<16x128xf32>
    %cst_112 = arith.constant 0.327591091 : f32
    %262 = vector.broadcast %cst_112 : f32 to vector<16x128xf32>
    %263 = arith.mulf %262, %261 : vector<16x128xf32>
    %cst_113 = arith.constant 1.000000e+00 : f32
    %264 = vector.broadcast %cst_113 : f32 to vector<16x128xf32>
    %265 = arith.addf %264, %263 : vector<16x128xf32>
    %cst_114 = arith.constant 1.000000e+00 : f32
    %266 = vector.broadcast %cst_114 : f32 to vector<16x128xf32>
    %267 = arith.divf %266, %265 : vector<16x128xf32>
    %cst_115 = arith.constant 1.06140542 : f32
    %268 = vector.broadcast %cst_115 : f32 to vector<16x128xf32>
    %269 = arith.mulf %268, %267 : vector<16x128xf32>
    %cst_116 = arith.constant -1.45315206 : f32
    %270 = vector.broadcast %cst_116 : f32 to vector<16x128xf32>
    %271 = arith.addf %269, %270 : vector<16x128xf32>
    %272 = arith.mulf %271, %267 : vector<16x128xf32>
    %cst_117 = arith.constant 1.42141378 : f32
    %273 = vector.broadcast %cst_117 : f32 to vector<16x128xf32>
    %274 = arith.addf %272, %273 : vector<16x128xf32>
    %275 = arith.mulf %274, %267 : vector<16x128xf32>
    %cst_118 = arith.constant -0.284496725 : f32
    %276 = vector.broadcast %cst_118 : f32 to vector<16x128xf32>
    %277 = arith.addf %275, %276 : vector<16x128xf32>
    %278 = arith.mulf %277, %267 : vector<16x128xf32>
    %cst_119 = arith.constant 0.254829586 : f32
    %279 = vector.broadcast %cst_119 : f32 to vector<16x128xf32>
    %280 = arith.addf %278, %279 : vector<16x128xf32>
    %281 = arith.mulf %280, %267 : vector<16x128xf32>
    %cst_120 = arith.constant 0.000000e+00 : f32
    %282 = vector.broadcast %cst_120 : f32 to vector<16x128xf32>
    %283 = arith.subf %282, %261 : vector<16x128xf32>
    %284 = arith.mulf %283, %261 : vector<16x128xf32>
    %285 = math.exp %284 : vector<16x128xf32>
    %286 = arith.mulf %281, %285 : vector<16x128xf32>
    %cst_121 = arith.constant 1.000000e+00 : f32
    %287 = vector.broadcast %cst_121 : f32 to vector<16x128xf32>
    %288 = arith.subf %287, %286 : vector<16x128xf32>
    %289 = arith.mulf %260, %288 : vector<16x128xf32>
    %cst_122 = arith.constant 1.000000e+00 : f32
    %290 = vector.broadcast %cst_122 : f32 to vector<16x128xf32>
    %291 = arith.addf %290, %289 : vector<16x128xf32>
    %292 = arith.mulf %253, %291 : vector<16x128xf32>
    %293 = arith.truncf %292 : vector<16x128xf32> to vector<16x128xbf16>
    %c1_123 = arith.constant 1 : index
    %c0_124 = arith.constant 0 : index
    %c0_125 = arith.constant 0 : index
    %294 = vector.load %arg10[%c1_123, %c0_124, %c0_125] : memref<2x128x64xbf16, #tpu.memory_space<vmem>>, vector<1x128x64xbf16>
    %295 = vector.shape_cast %294 : vector<1x128x64xbf16> to vector<128x64xbf16>
    %cst_126 = arith.constant dense<0.000000e+00> : vector<16x64xf32>
    %296 = tpu.matmul %293, %295, %cst_126 {dimension_numbers = #tpu.dot_dimension_numbers<[1], [0], [0], [1], [0, 0, 1, 1], [], []>} : vector<16x128xbf16>, vector<128x64xbf16>, vector<16x64xf32> -> vector<16x64xf32>
    %297 = arith.addf %219, %296 : vector<16x64xf32>
    %c1_127 = arith.constant 1 : index
    %c0_128 = arith.constant 0 : index
    %c0_129 = arith.constant 0 : index
    %298 = vector.load %arg11[%c1_127, %c0_128, %c0_129] : memref<2x1x64xf32, #tpu.memory_space<vmem>>, vector<1x1x64xf32>
    %299 = vector.shape_cast %298 : vector<1x1x64xf32> to vector<1x64xf32>
    %300 = vector.broadcast %299 : vector<1x64xf32> to vector<16x64xf32>
    %301 = arith.addf %297, %300 : vector<16x64xf32>
    %302 = vector.shape_cast %301 : vector<16x64xf32> to vector<2x8x64xf32>
    %303 = vector.extract_strided_slice %302 {offsets = [0, 0, 0], sizes = [2, 1, 64], strides = [1, 1, 1]} : vector<2x8x64xf32> to vector<2x1x64xf32>
    %304 = vector.shape_cast %303 : vector<2x1x64xf32> to vector<2x64xf32>
    %305 = arith.truncf %304 : vector<2x64xf32> to vector<2x64xbf16>
    %c0_130 = arith.constant 0 : index
    %c0_131 = arith.constant 0 : index
    %306 = vector.load %arg14[%c0_130, %c0_131] : memref<64x256xbf16, #tpu.memory_space<vmem>>, vector<64x256xbf16>
    %cst_132 = arith.constant dense<0.000000e+00> : vector<2x256xf32>
    %307 = tpu.matmul %305, %306, %cst_132 {dimension_numbers = #tpu.dot_dimension_numbers<[1], [0], [0], [1], [0, 0, 1, 1], [], []>} : vector<2x64xbf16>, vector<64x256xbf16>, vector<2x256xf32> -> vector<2x256xf32>
    %c0_133 = arith.constant 0 : index
    %c0_134 = arith.constant 0 : index
    %308 = vector.load %arg15[%c0_133, %c0_134] : memref<1x256xf32, #tpu.memory_space<vmem>>, vector<1x256xf32>
    %309 = vector.broadcast %308 : vector<1x256xf32> to vector<2x256xf32>
    %310 = arith.addf %307, %309 : vector<2x256xf32>
    %cst_135 = arith.constant 0.000000e+00 : f32
    %311 = vector.broadcast %cst_135 : f32 to vector<2x256xf32>
    %312 = arith.maximumf %310, %311 : vector<2x256xf32>
    %313 = arith.truncf %312 : vector<2x256xf32> to vector<2x256xbf16>
    %c0_136 = arith.constant 0 : index
    %c0_137 = arith.constant 0 : index
    %314 = vector.load %arg16[%c0_136, %c0_137] : memref<256x128xbf16, #tpu.memory_space<vmem>>, vector<256x128xbf16>
    %cst_138 = arith.constant dense<0.000000e+00> : vector<2x128xf32>
    %315 = tpu.matmul %313, %314, %cst_138 {dimension_numbers = #tpu.dot_dimension_numbers<[1], [0], [0], [1], [0, 0, 1, 1], [], []>} : vector<2x256xbf16>, vector<256x128xbf16>, vector<2x128xf32> -> vector<2x128xf32>
    %c0_139 = arith.constant 0 : index
    %c0_140 = arith.constant 0 : index
    %316 = vector.load %arg17[%c0_139, %c0_140] : memref<1x128xf32, #tpu.memory_space<vmem>>, vector<1x128xf32>
    %317 = vector.broadcast %316 : vector<1x128xf32> to vector<2x128xf32>
    %318 = arith.addf %315, %317 : vector<2x128xf32>
    %cst_141 = arith.constant 0.000000e+00 : f32
    %319 = vector.broadcast %cst_141 : f32 to vector<2x128xf32>
    %320 = arith.maximumf %318, %319 : vector<2x128xf32>
    %321 = arith.truncf %320 : vector<2x128xf32> to vector<2x128xbf16>
    %c0_142 = arith.constant 0 : index
    %c0_143 = arith.constant 0 : index
    %322 = vector.load %arg18[%c0_142, %c0_143] : memref<128x64xbf16, #tpu.memory_space<vmem>>, vector<128x64xbf16>
    %cst_144 = arith.constant dense<0.000000e+00> : vector<2x64xf32>
    %323 = tpu.matmul %321, %322, %cst_144 {dimension_numbers = #tpu.dot_dimension_numbers<[1], [0], [0], [1], [0, 0, 1, 1], [], []>} : vector<2x128xbf16>, vector<128x64xbf16>, vector<2x64xf32> -> vector<2x64xf32>
    %c0_145 = arith.constant 0 : index
    %c0_146 = arith.constant 0 : index
    %324 = vector.load %arg19[%c0_145, %c0_146] : memref<1x64xf32, #tpu.memory_space<vmem>>, vector<1x64xf32>
    %325 = vector.broadcast %324 : vector<1x64xf32> to vector<2x64xf32>
    %326 = arith.addf %323, %325 : vector<2x64xf32>
    %cst_147 = arith.constant 0.000000e+00 : f32
    %327 = vector.broadcast %cst_147 : f32 to vector<2x64xf32>
    %328 = arith.maximumf %326, %327 : vector<2x64xf32>
    %329 = arith.truncf %328 : vector<2x64xf32> to vector<2x64xbf16>
    %c0_148 = arith.constant 0 : index
    %c0_149 = arith.constant 0 : index
    %330 = vector.load %arg20[%c0_148, %c0_149] : memref<64x2xbf16, #tpu.memory_space<vmem>>, vector<64x2xbf16>
    %cst_150 = arith.constant dense<0.000000e+00> : vector<2x2xf32>
    %331 = tpu.matmul %329, %330, %cst_150 {dimension_numbers = #tpu.dot_dimension_numbers<[1], [0], [0], [1], [0, 0, 1, 1], [], []>} : vector<2x64xbf16>, vector<64x2xbf16>, vector<2x2xf32> -> vector<2x2xf32>
    %c0_151 = arith.constant 0 : index
    %c0_152 = arith.constant 0 : index
    %332 = vector.load %arg21[%c0_151, %c0_152] : memref<1x2xf32, #tpu.memory_space<vmem>>, vector<1x2xf32>
    %333 = vector.broadcast %332 : vector<1x2xf32> to vector<2x2xf32>
    %334 = arith.addf %331, %333 : vector<2x2xf32>
    %c0_153 = arith.constant 0 : index
    %c0_154 = arith.constant 0 : index
    %335 = vector.load %arg22[%c0_153, %c0_154] : memref<2x2xf32, #tpu.memory_space<vmem>>, vector<2x2xf32>
    tpu.vector_store %arg22[%c0_153, %c0_154], %334 {strides = array<i32>} : memref<2x2xf32, #tpu.memory_space<vmem>>, vector<2x2xf32>,
    return
  }
}

</mosaic_0001>

<llo_original>
// kernel: multimodel_forward.1
$region0: #{multimodel_forward.1}
  #allocation0 [shape = 'u32[]', space=smem, size = 0x4, offset = 0x4, fixed_abs, tag = 'smem constant byte address 0x4 - core index']
  #allocation1 [shape = 'u32[72,128]{1,0:T(1,128)}', space=vmem, size = 0x9000, scoped, tag = 'internal scratch']
  %s0 = inlined_call_operand.vmem [shape: bf16[16,192], index: 0, kind: input, shape index: {}]
  %s1 = inlined_call_operand.vmem [shape: bf16[192,64], index: 1, kind: input, shape index: {}]
  %s2 = inlined_call_operand.vmem [shape: f32[16,64], index: 2, kind: input, shape index: {}]
  %s3 = inlined_call_operand.vmem [shape: f32[2,4,64], index: 3, kind: input, shape index: {}]
  %s4 = inlined_call_operand.vmem [shape: bf16[2,64,192], index: 4, kind: input, shape index: {}]
  %s5 = inlined_call_operand.vmem [shape: f32[2,1,192], index: 5, kind: input, shape index: {}]
  %s6 = inlined_call_operand.vmem [shape: bf16[2,64,64], index: 6, kind: input, shape index: {}]
  %s7 = inlined_call_operand.vmem [shape: f32[2,1,64], index: 7, kind: input, shape index: {}]
  %s8 = inlined_call_operand.vmem [shape: bf16[2,64,128], index: 8, kind: input, shape index: {}]
  %s9 = inlined_call_operand.vmem [shape: f32[2,1,128], index: 9, kind: input, shape index: {}]
  %s10 = inlined_call_operand.vmem [shape: bf16[2,128,64], index: 10, kind: input, shape index: {}]
  %s11 = inlined_call_operand.vmem [shape: f32[2,1,64], index: 11, kind: input, shape index: {}]
  %s12 = inlined_call_operand.vmem [shape: f32[16,64], index: 12, kind: input, shape index: {}]
  %s13 = inlined_call_operand.vmem [shape: f32[64,64], index: 13, kind: input, shape index: {}]
  %s14 = inlined_call_operand.vmem [shape: bf16[64,256], index: 14, kind: input, shape index: {}]
  %s15 = inlined_call_operand.vmem [shape: f32[1,256], index: 15, kind: input, shape index: {}]
  %s16 = inlined_call_operand.vmem [shape: bf16[256,128], index: 16, kind: input, shape index: {}]
  %s17 = inlined_call_operand.vmem [shape: f32[1,128], index: 17, kind: input, shape index: {}]
  %s18 = inlined_call_operand.vmem [shape: bf16[128,64], index: 18, kind: input, shape index: {}]
  %s19 = inlined_call_operand.vmem [shape: f32[1,64], index: 19, kind: input, shape index: {}]
  %s20 = inlined_call_operand.vmem [shape: bf16[64,2], index: 20, kind: input, shape index: {}]
  %s21 = inlined_call_operand.vmem [shape: f32[1,2], index: 21, kind: input, shape index: {}]
  %s22 = inlined_call_operand.hbm [shape: f32[2,2], index: 22, kind: output, shape index: {}]
  %s23 = sld [smem:[#allocation0]]
  $region98: #{multimodel_forward.1} parent=0
    _
  %s25 = ssub.s32 1, %s23
  %s26 = scalar_select 0, %s25, %s23
  $region1: #{multimodel_forward.1} parent=0
    #allocation2 [shape = 'u8[1024]{0}', space=vmem, size = 0x400, scoped, tag = 'output window, operand 0, single buffered']
    #allocation3 [shape = 's32[1]{0}', space=sflag, size = 0x4, scoped, tag = 'scoped memory for multimodel_forward.1']
    %27 = vsyncpa [#allocation3], 0
    // Predicated region
    $region2: #{multimodel_forward.1} parent=1 // pred_check
      _
    $region3: #{multimodel_forward.1} parent=1 // pred_check_branch
      %29 = sbr.rel (0) target = $region5
    $region4: #{multimodel_forward.1} parent=1 // pred_region
      _
    $region5: #{multimodel_forward.1} parent=1 // pred_fallthru
      _
    // Predicated region
    $region6: #{multimodel_forward.1} parent=1 // pred_check
      _
    $region7: #{multimodel_forward.1} parent=1 // pred_check_branch
      %31 = sbr.rel (0) target = $region9
    $region8: #{multimodel_forward.1} parent=1 // pred_region
      _
    $region9: #{multimodel_forward.1} parent=1 // pred_fallthru
      _
    // Predicated region
    $region10: #{multimodel_forward.1} parent=1 // pred_check
      _
    $region11: #{multimodel_forward.1} parent=1 // pred_check_branch
      %33 = sbr.rel (0) target = $region13
    $region12: #{multimodel_forward.1} parent=1 // pred_region
      _
    $region13: #{multimodel_forward.1} parent=1 // pred_fallthru
      _
    // Predicated region
    $region14: #{multimodel_forward.1} parent=1 // pred_check
      _
    $region15: #{multimodel_forward.1} parent=1 // pred_check_branch
      %35 = sbr.rel (0) target = $region17
    $region16: #{multimodel_forward.1} parent=1 // pred_region
      _
    $region17: #{multimodel_forward.1} parent=1 // pred_fallthru
      _
    // Predicated region
    $region18: #{multimodel_forward.1} parent=1 // pred_check
      _
    $region19: #{multimodel_forward.1} parent=1 // pred_check_branch
      %37 = sbr.rel (0) target = $region21
    $region20: #{multimodel_forward.1} parent=1 // pred_region
      _
    $region21: #{multimodel_forward.1} parent=1 // pred_fallthru
      _
    // Predicated region
    $region22: #{multimodel_forward.1} parent=1 // pred_check
      _
    $region23: #{multimodel_forward.1} parent=1 // pred_check_branch
      %39 = sbr.rel (0) target = $region25
    $region24: #{multimodel_forward.1} parent=1 // pred_region
      _
    $region25: #{multimodel_forward.1} parent=1 // pred_fallthru
      _
    // Predicated region
    $region26: #{multimodel_forward.1} parent=1 // pred_check
      _
    $region27: #{multimodel_forward.1} parent=1 // pred_check_branch
      %41 = sbr.rel (0) target = $region29
    $region28: #{multimodel_forward.1} parent=1 // pred_region
      _
    $region29: #{multimodel_forward.1} parent=1 // pred_fallthru
      _
    // Predicated region
    $region30: #{multimodel_forward.1} parent=1 // pred_check
      _
    $region31: #{multimodel_forward.1} parent=1 // pred_check_branch
      %43 = sbr.rel (0) target = $region33
    $region32: #{multimodel_forward.1} parent=1 // pred_region
      _
    $region33: #{multimodel_forward.1} parent=1 // pred_fallthru
      _
    // Predicated region
    $region34: #{multimodel_forward.1} parent=1 // pred_check
      _
    $region35: #{multimodel_forward.1} parent=1 // pred_check_branch
      %45 = sbr.rel (0) target = $region37
    $region36: #{multimodel_forward.1} parent=1 // pred_region
      _
    $region37: #{multimodel_forward.1} parent=1 // pred_fallthru
      _
    // Predicated region
    $region38: #{multimodel_forward.1} parent=1 // pred_check
      _
    $region39: #{multimodel_forward.1} parent=1 // pred_check_branch
      %47 = sbr.rel (0) target = $region41
    $region40: #{multimodel_forward.1} parent=1 // pred_region
      _
    $region41: #{multimodel_forward.1} parent=1 // pred_fallthru
      _
    // Predicated region
    $region42: #{multimodel_forward.1} parent=1 // pred_check
      _
    $region43: #{multimodel_forward.1} parent=1 // pred_check_branch
      %49 = sbr.rel (0) target = $region45
    $region44: #{multimodel_forward.1} parent=1 // pred_region
      _
    $region45: #{multimodel_forward.1} parent=1 // pred_fallthru
      _
    // Predicated region
    $region46: #{multimodel_forward.1} parent=1 // pred_check
      _
    $region47: #{multimodel_forward.1} parent=1 // pred_check_branch
      %51 = sbr.rel (0) target = $region49
    $region48: #{multimodel_forward.1} parent=1 // pred_region
      _
    $region49: #{multimodel_forward.1} parent=1 // pred_fallthru
      _
    // Predicated region
    $region50: #{multimodel_forward.1} parent=1 // pred_check
      _
    $region51: #{multimodel_forward.1} parent=1 // pred_check_branch
      %53 = sbr.rel (0) target = $region53
    $region52: #{multimodel_forward.1} parent=1 // pred_region
      _
    $region53: #{multimodel_forward.1} parent=1 // pred_fallthru
      _
    // Predicated region
    $region54: #{multimodel_forward.1} parent=1 // pred_check
      _
    $region55: #{multimodel_forward.1} parent=1 // pred_check_branch
      %55 = sbr.rel (0) target = $region57
    $region56: #{multimodel_forward.1} parent=1 // pred_region
      _
    $region57: #{multimodel_forward.1} parent=1 // pred_fallthru
      _
    // Predicated region
    $region58: #{multimodel_forward.1} parent=1 // pred_check
      _
    $region59: #{multimodel_forward.1} parent=1 // pred_check_branch
      %57 = sbr.rel (0) target = $region61
    $region60: #{multimodel_forward.1} parent=1 // pred_region
      _
    $region61: #{multimodel_forward.1} parent=1 // pred_fallthru
      _
    // Predicated region
    $region62: #{multimodel_forward.1} parent=1 // pred_check
      _
    $region63: #{multimodel_forward.1} parent=1 // pred_check_branch
      %59 = sbr.rel (0) target = $region65
    $region64: #{multimodel_forward.1} parent=1 // pred_region
      _
    $region65: #{multimodel_forward.1} parent=1 // pred_fallthru
      _
    // Predicated region
    $region66: #{multimodel_forward.1} parent=1 // pred_check
      _
    $region67: #{multimodel_forward.1} parent=1 // pred_check_branch
      %61 = sbr.rel (0) target = $region69
    $region68: #{multimodel_forward.1} parent=1 // pred_region
      _
    $region69: #{multimodel_forward.1} parent=1 // pred_fallthru
      _
    // Predicated region
    $region70: #{multimodel_forward.1} parent=1 // pred_check
      _
    $region71: #{multimodel_forward.1} parent=1 // pred_check_branch
      %63 = sbr.rel (0) target = $region73
    $region72: #{multimodel_forward.1} parent=1 // pred_region
      _
    $region73: #{multimodel_forward.1} parent=1 // pred_fallthru
      _
    // Predicated region
    $region74: #{multimodel_forward.1} parent=1 // pred_check
      _
    $region75: #{multimodel_forward.1} parent=1 // pred_check_branch
      %65 = sbr.rel (0) target = $region77
    $region76: #{multimodel_forward.1} parent=1 // pred_region
      _
    $region77: #{multimodel_forward.1} parent=1 // pred_fallthru
      _
    // Predicated region
    $region78: #{multimodel_forward.1} parent=1 // pred_check
      _
    $region79: #{multimodel_forward.1} parent=1 // pred_check_branch
      %67 = sbr.rel (0) target = $region81
    $region80: #{multimodel_forward.1} parent=1 // pred_region
      _
    $region81: #{multimodel_forward.1} parent=1 // pred_fallthru
      _
    // Predicated region
    $region82: #{multimodel_forward.1} parent=1 // pred_check
      _
    $region83: #{multimodel_forward.1} parent=1 // pred_check_branch
      %69 = sbr.rel (0) target = $region85
    $region84: #{multimodel_forward.1} parent=1 // pred_region
      _
    $region85: #{multimodel_forward.1} parent=1 // pred_fallthru
      _
    // Predicated region
    $region86: #{multimodel_forward.1} parent=1 // pred_check
      _
    $region87: #{multimodel_forward.1} parent=1 // pred_check_branch
      %71 = sbr.rel (0) target = $region89
    $region88: #{multimodel_forward.1} parent=1 // pred_region
      _
    $region89: #{multimodel_forward.1} parent=1 // pred_fallthru
      _
    %v73 = vld [vmem:[%s0] sm:$0xff]
    %v74 = vld [vmem:[%s0 + $0x8] sm:$0xff]
    %v75 = vld [vmem:[%s1] sm:$0xf]
    %v76 = vld [vmem:[%s1 + $0x4] sm:$0xf]
    %v77 = vld [vmem:[%s1 + $0x8] sm:$0xf]
    %v78 = vld [vmem:[%s1 + $0xc] sm:$0xf]
    %v79 = vld [vmem:[%s1 + $0x10] sm:$0xf]
    %v80 = vld [vmem:[%s1 + $0x14] sm:$0xf]
    %v81 = vld [vmem:[%s1 + $0x18] sm:$0xf]
    %v82 = vld [vmem:[%s1 + $0x1c] sm:$0xf]
    %v83 = vld [vmem:[%s1 + $0x20] sm:$0xf]
    %v84 = vld [vmem:[%s1 + $0x24] sm:$0xf]
    %v85 = vld [vmem:[%s1 + $0x28] sm:$0xf]
    %v86 = vld [vmem:[%s1 + $0x2c] sm:$0xf]
    %v87 = vld [vmem:[%s1 + $0x30] sm:$0xf]
    %v88 = vld [vmem:[%s1 + $0x34] sm:$0xf]
    %v89 = vld [vmem:[%s1 + $0x38] sm:$0xf]
    %v90 = vld [vmem:[%s1 + $0x3c] sm:$0xf]
    %v91 = vld [vmem:[%s1 + $0x40] sm:$0xf]
    %v92 = vld [vmem:[%s1 + $0x44] sm:$0xf]
    %v93 = vld [vmem:[%s1 + $0x48] sm:$0xf]
    %v94 = vld [vmem:[%s1 + $0x4c] sm:$0xf]
    %v95 = vld [vmem:[%s1 + $0x50] sm:$0xf]
    %v96 = vld [vmem:[%s1 + $0x54] sm:$0xf]
    %v97 = vld [vmem:[%s1 + $0x58] sm:$0xf]
    %v98 = vld [vmem:[%s1 + $0x5c] sm:$0xf]
    %v99 = vld [vmem:[%s2] sm:$0xff]
    %v100 = vld [vmem:[%s2 + $0x8] sm:$0xff]
    %v103 = vunpack.c.l.b16 %v73
    %v104 = vunpack.c.h.b16 %v73
    %v105 = vunpack.c.l.b16 %v74
    %v106 = vunpack.c.h.b16 %v74
    %v107 = vpack.c.b16 %v105, %v103
    %v108 = vpack.c.b16 %v106, %v104
    %v134 = vunpack.c.l.b16 %v75
    %v135 = vunpack.c.l.b16 %v76
    %v136 = vunpack.c.l.b16 %v77
    %v137 = vunpack.c.l.b16 %v78
    %v138 = vunpack.c.l.b16 %v79
    %v139 = vunpack.c.l.b16 %v80
    %v140 = vunpack.c.l.b16 %v81
    %v141 = vunpack.c.l.b16 %v82
    %v142 = vunpack.c.l.b16 %v83
    %v143 = vunpack.c.l.b16 %v84
    %v144 = vunpack.c.l.b16 %v85
    %v145 = vunpack.c.l.b16 %v86
    %v146 = vunpack.c.l.b16 %v87
    %v147 = vunpack.c.l.b16 %v88
    %v148 = vunpack.c.l.b16 %v89
    %v149 = vunpack.c.l.b16 %v90
    %v150 = vunpack.c.l.b16 %v91
    %v151 = vunpack.c.l.b16 %v92
    %v152 = vunpack.c.l.b16 %v93
    %v153 = vunpack.c.l.b16 %v94
    %v154 = vunpack.c.l.b16 %v95
    %v155 = vunpack.c.l.b16 %v96
    %v156 = vunpack.c.l.b16 %v97
    %v157 = vunpack.c.l.b16 %v98
    %v158 = vpack.c.b16 %v135, %v134
    %v159 = vpack.c.b16 %v137, %v136
    %v160 = vpack.c.b16 %v139, %v138
    %v161 = vpack.c.b16 %v141, %v140
    %v162 = vpack.c.b16 %v143, %v142
    %v163 = vpack.c.b16 %v145, %v144
    %v164 = vpack.c.b16 %v147, %v146
    %v165 = vpack.c.b16 %v149, %v148
    %v166 = vpack.c.b16 %v151, %v150
    %v167 = vpack.c.b16 %v153, %v152
    %v168 = vpack.c.b16 %v155, %v154
    %v169 = vpack.c.b16 %v157, %v156
    %vm182 = vcmask 523264
    %v184 = vsel %vm182, %v108, 0
    %186 = vmatpush.bf16.msra.mxu0 %v165
    %187 = vmatpush.bf16.msra.mxu0 %v164
    %188 = vmatpush.bf16.msra.mxu0 %v163
    %189 = vmatpush.bf16.msra.mxu0 %v162
    %190 = vmatpush.bf16.msra.mxu0 %v161
    %191 = vmatpush.bf16.msra.mxu0 %v160
    %192 = vmatpush.bf16.msra.mxu0 %v159
    %193 = vmatpush.bf16.msra.mxu0 %v158
    %194 = vmatmul.bf16.gmra.mxu0 %v107
    %v195 = vpop.f32.mrf.mxu0
    %v196 = vadd.f32 %v99, %v195
    %v197 = vpop.f32.mrf.mxu0
    %v198 = vadd.f32 %v100, %v197
    %199 = vdwg.mxu0
    %200 = vmatpush.bf16.msra.mxu0 0
    %201 = vmatpush.bf16.msra.mxu0 0
    %202 = vmatpush.bf16.msra.mxu0 0
    %203 = vmatpush.bf16.msra.mxu0 0
    %204 = vmatpush.bf16.msra.mxu0 %v169
    %205 = vmatpush.bf16.msra.mxu0 %v168
    %206 = vmatpush.bf16.msra.mxu0 %v167
    %207 = vmatpush.bf16.msra.mxu0 %v166
    %208 = vmatmul.bf16.gmra.mxu0 %v184
    %v209 = vpop.f32.mrf.mxu0
    %v210 = vadd.f32 %v196, %v209
    %v211 = vpop.f32.mrf.mxu0
    %v212 = vadd.f32 %v198, %v211
    %213 = vdwg.mxu0
    %v214 = vld [vmem:[%s12] sm:$0xff]
    %v215 = vld [vmem:[%s12 + $0x8] sm:$0xff]
    %v216 = vld [vmem:[%s13] sm:$0xff]
    %v217 = vld [vmem:[%s13 + $0x8] sm:$0xff]
    %v218 = vld [vmem:[%s13 + $0x10] sm:$0xff]
    %v219 = vld [vmem:[%s13 + $0x18] sm:$0xff]
    %v220 = vld [vmem:[%s13 + $0x20] sm:$0xff]
    %v221 = vld [vmem:[%s13 + $0x28] sm:$0xff]
    %v222 = vld [vmem:[%s13 + $0x30] sm:$0xff]
    %v223 = vld [vmem:[%s13 + $0x38] sm:$0xff]
    %v224 = vpack.c.bf16 %v217, %v216
    %v225 = vpack.c.bf16 %v219, %v218
    %v226 = vpack.c.bf16 %v221, %v220
    %v227 = vpack.c.bf16 %v223, %v222
    %v228 = vld [vmem:[%s3] sm:$0xf]
    %v229 = vsel %vm182, %v210, 0.0
    %230 = vadd.xlane.f32.xlu0 %v229
    %v231 = vpop.xlane.xlu0 %230
    %v232 = vsel %vm182, %v212, 0.0
    %233 = vadd.xlane.f32.xlu0 %v232
    %v234 = vpop.xlane.xlu0 %233
    %v235 = vrcp.pop 64.0
    %v236 = vmul.f32 64.0, %v235
    %v237 = vsub.f32 1.0, %v236
    %v238 = vmul.f32 %v235, %v237
    %v239 = vadd.f32 %v235, %v238
    %vm240 = vweird.f32 %v235
    %v241 = vsel %vm240, %v235, %v239
    %v242 = vmul.f32 %v231, %v241
    %v243 = vmul.f32 %v234, %v241
    %v244 = vsub.f32 %v210, %v242
    %v245 = vsub.f32 %v212, %v243
    %v246 = vmul.f32 %v244, %v244
    %v247 = vmul.f32 %v245, %v245
    %v248 = vsel %vm182, %v246, 0.0
    %249 = vadd.xlane.f32.xlu0 %v248
    %v250 = vpop.xlane.xlu0 %249
    %v251 = vsel %vm182, %v247, 0.0
    %252 = vadd.xlane.f32.xlu0 %v251
    %v253 = vpop.xlane.xlu0 %252
    %v254 = vmul.f32 %v250, %v241
    %v255 = vmul.f32 %v253, %v241
    %v256 = vadd.f32 %v254, 1e-12
    %v257 = vadd.f32 %v255, 1e-12
    %v258 = vrsqrt.pop %v256
    %v259 = vmul.f32 %v258, %v256
    %v260 = vmul.f32 %v259, %v258
    %v261 = vmul.f32 0.5, %v260
    %v262 = vsub.f32 1.5, %v261
    %v263 = vmul.f32 %v258, %v262
    %vm264 = vweird.f32 %v256
    %vm265 = vweird.f32 %v258
    %vm266 = vmor %vm264, %vm265
    %v267 = vsel %vm266, %v258, %v263
    %v268 = vrsqrt.pop %v257
    %v269 = vmul.f32 %v268, %v257
    %v270 = vmul.f32 %v269, %v268
    %v271 = vmul.f32 0.5, %v270
    %v272 = vsub.f32 1.5, %v271
    %v273 = vmul.f32 %v268, %v272
    %vm274 = vweird.f32 %v257
    %vm275 = vweird.f32 %v268
    %vm276 = vmor %vm274, %vm275
    %v277 = vsel %vm276, %v268, %v273
    %v278 = vmul.f32 %v244, %v267
    %v279 = vmul.f32 %v245, %v277
    %v280 = vperm.slane %v228, 0
    %v281 = vmul.f32 %v278, %v280
    %v282 = vmul.f32 %v279, %v280
    %v283 = vperm.slane %v228, 1
    %v284 = vadd.f32 %v281, %v283
    %v285 = vadd.f32 %v282, %v283
    %v286 = vpack.c.bf16 %v285, %v284
    %v287 = vld [vmem:[%s4] sm:$0xff]
    %v288 = vld [vmem:[%s4 + $0x8] sm:$0xff]
    %v289 = vld [vmem:[%s4 + $0x10] sm:$0xff]
    %v290 = vld [vmem:[%s4 + $0x18] sm:$0xff]
    %v291 = vld [vmem:[%s4 + $0x20] sm:$0xff]
    %v292 = vld [vmem:[%s4 + $0x28] sm:$0xff]
    %v293 = vld [vmem:[%s4 + $0x30] sm:$0xff]
    %v294 = vld [vmem:[%s4 + $0x38] sm:$0xff]
    %v295 = vld [vmem:[%s5] sm:$0x3]
    %v297 = vperm.slane %v295, 0
    %v298 = vperm.slane %v295, 1
    %v309 = vunpack.c.l.b16 %v287
    %v310 = vunpack.c.h.b16 %v287
    %v311 = vunpack.c.l.b16 %v288
    %v312 = vunpack.c.h.b16 %v288
    %v313 = vunpack.c.l.b16 %v289
    %v314 = vunpack.c.h.b16 %v289
    %v315 = vunpack.c.l.b16 %v290
    %v316 = vunpack.c.h.b16 %v290
    %v317 = vunpack.c.l.b16 %v291
    %v318 = vunpack.c.h.b16 %v291
    %v319 = vunpack.c.l.b16 %v292
    %v320 = vunpack.c.h.b16 %v292
    %v321 = vunpack.c.l.b16 %v293
    %v322 = vunpack.c.h.b16 %v293
    %v323 = vunpack.c.l.b16 %v294
    %v324 = vunpack.c.h.b16 %v294
    %v325 = vpack.c.b16 %v311, %v309
    %v326 = vpack.c.b16 %v312, %v310
    %v327 = vpack.c.b16 %v315, %v313
    %v328 = vpack.c.b16 %v316, %v314
    %v329 = vpack.c.b16 %v319, %v317
    %v330 = vpack.c.b16 %v320, %v318
    %v331 = vpack.c.b16 %v323, %v321
    %v332 = vpack.c.b16 %v324, %v322
    %v342 = vsel %vm182, %v286, 0
    %344 = vmatpush.bf16.msra.mxu0 0
    %345 = vmatpush.bf16.msra.mxu0 0
    %346 = vmatpush.bf16.msra.mxu0 0
    %347 = vmatpush.bf16.msra.mxu0 0
    %348 = vmatpush.bf16.msra.mxu0 %v331
    %349 = vmatpush.bf16.msra.mxu0 %v329
    %350 = vmatpush.bf16.msra.mxu0 %v327
    %351 = vmatpush.bf16.msra.mxu0 %v325
    %352 = vmatmul.bf16.gmra.mxu0 %v342
    %v353 = vpop.f32.mrf.mxu0
    %v354 = vadd.f32 %v297, %v353
    %v355 = vpop.f32.mrf.mxu0
    %v356 = vadd.f32 %v297, %v355
    %357 = vdwg.mxu0
    %358 = vmatpush.bf16.msra.mxu0 0
    %359 = vmatpush.bf16.msra.mxu0 0
    %360 = vmatpush.bf16.msra.mxu0 0
    %361 = vmatpush.bf16.msra.mxu0 0
    %362 = vmatpush.bf16.msra.mxu0 %v332
    %363 = vmatpush.bf16.msra.mxu0 %v330
    %364 = vmatpush.bf16.msra.mxu0 %v328
    %365 = vmatpush.bf16.msra.mxu0 %v326
    %366 = vmatmul.bf16.gmra.mxu0 %v342
    %v367 = vpop.f32.mrf.mxu0
    %v368 = vadd.f32 %v298, %v367
    %v369 = vpop.f32.mrf.mxu0
    %v370 = vadd.f32 %v298, %v369
    %371 = vdwg.mxu0
    %380 = vrot.lane.b32.xlu0 %v216, 64
    %v381 = vpop.permute.xlu0 %380
    %382 = vrot.lane.b32.xlu0 %v217, 64
    %v383 = vpop.permute.xlu0 %382
    %384 = vrot.lane.b32.xlu0 %v218, 64
    %v385 = vpop.permute.xlu0 %384
    %386 = vrot.lane.b32.xlu0 %v219, 64
    %v387 = vpop.permute.xlu0 %386
    %388 = vrot.lane.b32.xlu0 %v220, 64
    %v389 = vpop.permute.xlu0 %388
    %390 = vrot.lane.b32.xlu0 %v221, 64
    %v391 = vpop.permute.xlu0 %390
    %392 = vrot.lane.b32.xlu0 %v222, 64
    %v393 = vpop.permute.xlu0 %392
    %394 = vrot.lane.b32.xlu0 %v223, 64
    %v395 = vpop.permute.xlu0 %394
    %v404 = vmul.f32 %v354, %v381
    %v405 = vmul.f32 %v356, %v383
    %v406 = vmul.f32 %v354, %v385
    %v407 = vmul.f32 %v356, %v387
    %v408 = vmul.f32 %v354, %v389
    %v409 = vmul.f32 %v356, %v391
    %v410 = vmul.f32 %v354, %v393
    %v411 = vmul.f32 %v356, %v395
    %v412 = vpack.c.bf16 %v405, %v404
    %v413 = vpack.c.bf16 %v407, %v406
    %v414 = vpack.c.bf16 %v409, %v408
    %v415 = vpack.c.bf16 %v411, %v410
    %v416 = vmul.f32 %v368, %v216
    %v417 = vmul.f32 %v370, %v217
    %v418 = vmul.f32 %v368, %v218
    %v419 = vmul.f32 %v370, %v219
    %v420 = vmul.f32 %v368, %v220
    %v421 = vmul.f32 %v370, %v221
    %v422 = vmul.f32 %v368, %v222
    %v423 = vmul.f32 %v370, %v223
    %v424 = vpack.c.bf16 %v417, %v416
    %v425 = vpack.c.bf16 %v419, %v418
    %v426 = vpack.c.bf16 %v421, %v420
    %v427 = vpack.c.bf16 %v423, %v422
    %v428 = vpack.c.bf16 %v356, %v354
    %433 = vrot.lane.b32.xlu0 %v412, 64
    %v434 = vpop.permute.xlu0 %433
    %435 = vrot.lane.b32.xlu0 %v413, 64
    %v436 = vpop.permute.xlu0 %435
    %437 = vrot.lane.b32.xlu0 %v414, 64
    %v438 = vpop.permute.xlu0 %437
    %439 = vrot.lane.b32.xlu0 %v415, 64
    %v440 = vpop.permute.xlu0 %439
    %v442 = vsel %vm182, %v428, 0
    %v445 = vsel %vm182, %v434, 0
    %v448 = vsel %vm182, %v436, 0
    %v451 = vsel %vm182, %v438, 0
    %v454 = vsel %vm182, %v440, 0
    %456 = vmatpush.bf16.xpose.msra.mxu0 0
    %457 = vmatpush.bf16.xpose.msra.mxu0 0
    %458 = vmatpush.bf16.xpose.msra.mxu0 0
    %459 = vmatpush.bf16.xpose.msra.mxu0 0
    %460 = vmatpush.bf16.xpose.msra.mxu0 %v454
    %461 = vmatpush.bf16.xpose.msra.mxu0 %v451
    %462 = vmatpush.bf16.xpose.msra.mxu0 %v448
    %463 = vmatpush.bf16.xpose.msra.mxu0 %v445
    %464 = vmatmul.bf16.gmra.mxu0 %v442
    %v465 = vpop.f32.mrf.mxu0
    %v466 = vadd.f32 %v214, %v465
    %v467 = vpop.f32.mrf.mxu0
    %v468 = vadd.f32 %v215, %v467
    %469 = vdwg.mxu0
    %v470 = vsel %vm182, %v466, -inf
    %471 = vmax.xlane.f32.xlu0 %v470
    %v472 = vpop.xlane.xlu0 %471
    %v473 = vsel %vm182, %v468, -inf
    %474 = vmax.xlane.f32.xlu0 %v473
    %v475 = vpop.xlane.xlu0 %474
    %v476 = vsub.f32 %v466, %v472
    %v477 = vsub.f32 %v468, %v475
    %v478 = vmul.f32 %v476, 1.442695
    %v479 = vpow.pop %v478
    %v480 = vmul.f32 %v477, 1.442695
    %v481 = vpow.pop %v480
    %v482 = vpack.c.bf16 %v481, %v479
    %v484 = vsel %vm182, %v482, 0
    %486 = vmatpush.bf16.msra.mxu0 0
    %487 = vmatpush.bf16.msra.mxu0 0
    %488 = vmatpush.bf16.msra.mxu0 0
    %489 = vmatpush.bf16.msra.mxu0 0
    %490 = vmatpush.bf16.msra.mxu0 %v427
    %491 = vmatpush.bf16.msra.mxu0 %v426
    %492 = vmatpush.bf16.msra.mxu0 %v425
    %493 = vmatpush.bf16.msra.mxu0 %v424
    %494 = vmatmul.bf16.gmra.mxu0 %v484
    %v495 = vpop.f32.mrf.mxu0
    %v496 = vadd.f32 0.0, %v495
    %v497 = vpop.f32.mrf.mxu0
    %v498 = vadd.f32 0.0, %v497
    %499 = vdwg.mxu0
    %500 = vmatpush.bf16.msra.mxu0 0
    %501 = vmatpush.bf16.msra.mxu0 0
    %502 = vmatpush.bf16.msra.mxu0 0
    %503 = vmatpush.bf16.msra.mxu0 0
    %504 = vmatpush.bf16.msra.mxu0 %v227
    %505 = vmatpush.bf16.msra.mxu0 %v226
    %506 = vmatpush.bf16.msra.mxu0 %v225
    %507 = vmatpush.bf16.msra.mxu0 %v224
    %508 = vmatmul.bf16.gmra.mxu0 %v484
    %v509 = vpop.f32.mrf.mxu0
    %v510 = vadd.f32 0.0, %v509
    %v511 = vpop.f32.mrf.mxu0
    %v512 = vadd.f32 0.0, %v511
    %513 = vdwg.mxu0
    %v514 = vrcp.pop %v510
    %v515 = vrcp.pop %v512
    %v516 = vmul.f32 %v496, %v514
    %v517 = vmul.f32 %v498, %v515
    %v518 = vpack.c.bf16 %v517, %v516
    %v519 = vld [vmem:[%s6] sm:$0xf]
    %v520 = vld [vmem:[%s6 + $0x4] sm:$0xf]
    %v521 = vld [vmem:[%s6 + $0x8] sm:$0xf]
    %v522 = vld [vmem:[%s6 + $0xc] sm:$0xf]
    %v523 = vld [vmem:[%s6 + $0x10] sm:$0xf]
    %v524 = vld [vmem:[%s6 + $0x14] sm:$0xf]
    %v525 = vld [vmem:[%s6 + $0x18] sm:$0xf]
    %v526 = vld [vmem:[%s6 + $0x1c] sm:$0xf]
    %v535 = vunpack.c.l.b16 %v519
    %v536 = vunpack.c.l.b16 %v520
    %v537 = vunpack.c.l.b16 %v521
    %v538 = vunpack.c.l.b16 %v522
    %v539 = vunpack.c.l.b16 %v523
    %v540 = vunpack.c.l.b16 %v524
    %v541 = vunpack.c.l.b16 %v525
    %v542 = vunpack.c.l.b16 %v526
    %v543 = vpack.c.b16 %v536, %v535
    %v544 = vpack.c.b16 %v538, %v537
    %v545 = vpack.c.b16 %v540, %v539
    %v546 = vpack.c.b16 %v542, %v541
    %v552 = vsel %vm182, %v518, 0
    %554 = vmatpush.bf16.msra.mxu0 0
    %555 = vmatpush.bf16.msra.mxu0 0
    %556 = vmatpush.bf16.msra.mxu0 0
    %557 = vmatpush.bf16.msra.mxu0 0
    %558 = vmatpush.bf16.msra.mxu0 %v546
    %559 = vmatpush.bf16.msra.mxu0 %v545
    %560 = vmatpush.bf16.msra.mxu0 %v544
    %561 = vmatpush.bf16.msra.mxu0 %v543
    %562 = vmatmul.bf16.gmra.mxu0 %v552
    %v563 = vpop.f32.mrf.mxu0
    %v564 = vadd.f32 0.0, %v563
    %v565 = vpop.f32.mrf.mxu0
    %v566 = vadd.f32 0.0, %v565
    %567 = vdwg.mxu0
    %v568 = vadd.f32 %v210, %v564
    %v569 = vadd.f32 %v212, %v566
    %v570 = vld [vmem:[%s7] sm:$0x1]
    %v572 = vperm.slane %v570, 0
    %v574 = vadd.f32 %v568, %v572
    %v575 = vadd.f32 %v569, %v572
    %v576 = vsel %vm182, %v574, 0.0
    %577 = vadd.xlane.f32.xlu0 %v576
    %v578 = vpop.xlane.xlu0 %577
    %v579 = vsel %vm182, %v575, 0.0
    %580 = vadd.xlane.f32.xlu0 %v579
    %v581 = vpop.xlane.xlu0 %580
    %v582 = vmul.f32 %v578, %v241
    %v583 = vmul.f32 %v581, %v241
    %v584 = vsub.f32 %v574, %v582
    %v585 = vsub.f32 %v575, %v583
    %v586 = vmul.f32 %v584, %v584
    %v587 = vmul.f32 %v585, %v585
    %v588 = vsel %vm182, %v586, 0.0
    %589 = vadd.xlane.f32.xlu0 %v588
    %v590 = vpop.xlane.xlu0 %589
    %v591 = vsel %vm182, %v587, 0.0
    %592 = vadd.xlane.f32.xlu0 %v591
    %v593 = vpop.xlane.xlu0 %592
    %v594 = vmul.f32 %v590, %v241
    %v595 = vmul.f32 %v593, %v241
    %v596 = vadd.f32 %v594, 1e-12
    %v597 = vadd.f32 %v595, 1e-12
    %v598 = vrsqrt.pop %v596
    %v599 = vmul.f32 %v598, %v596
    %v600 = vmul.f32 %v599, %v598
    %v601 = vmul.f32 0.5, %v600
    %v602 = vsub.f32 1.5, %v601
    %v603 = vmul.f32 %v598, %v602
    %vm604 = vweird.f32 %v596
    %vm605 = vweird.f32 %v598
    %vm606 = vmor %vm604, %vm605
    %v607 = vsel %vm606, %v598, %v603
    %v608 = vrsqrt.pop %v597
    %v609 = vmul.f32 %v608, %v597
    %v610 = vmul.f32 %v609, %v608
    %v611 = vmul.f32 0.5, %v610
    %v612 = vsub.f32 1.5, %v611
    %v613 = vmul.f32 %v608, %v612
    %vm614 = vweird.f32 %v597
    %vm615 = vweird.f32 %v608
    %vm616 = vmor %vm614, %vm615
    %v617 = vsel %vm616, %v608, %v613
    %v618 = vmul.f32 %v584, %v607
    %v619 = vmul.f32 %v585, %v617
    %v620 = vperm.slane %v228, 2
    %v621 = vmul.f32 %v618, %v620
    %v622 = vmul.f32 %v619, %v620
    %v623 = vperm.slane %v228, 3
    %v624 = vadd.f32 %v621, %v623
    %v625 = vadd.f32 %v622, %v623
    %v626 = vpack.c.bf16 %v625, %v624
    %v627 = vld [vmem:[%s8] sm:$0xf]
    %v628 = vld [vmem:[%s8 + $0x4] sm:$0xf]
    %v629 = vld [vmem:[%s8 + $0x8] sm:$0xf]
    %v630 = vld [vmem:[%s8 + $0xc] sm:$0xf]
    %v631 = vld [vmem:[%s8 + $0x10] sm:$0xf]
    %v632 = vld [vmem:[%s8 + $0x14] sm:$0xf]
    %v633 = vld [vmem:[%s8 + $0x18] sm:$0xf]
    %v634 = vld [vmem:[%s8 + $0x1c] sm:$0xf]
    %v635 = vld [vmem:[%s9] sm:$0x1]
    %v637 = vperm.slane %v635, 0
    %v647 = vunpack.c.l.b16 %v627
    %v648 = vunpack.c.l.b16 %v628
    %v649 = vunpack.c.l.b16 %v629
    %v650 = vunpack.c.l.b16 %v630
    %v651 = vunpack.c.l.b16 %v631
    %v652 = vunpack.c.l.b16 %v632
    %v653 = vunpack.c.l.b16 %v633
    %v654 = vunpack.c.l.b16 %v634
    %v655 = vpack.c.b16 %v648, %v647
    %v656 = vpack.c.b16 %v650, %v649
    %v657 = vpack.c.b16 %v652, %v651
    %v658 = vpack.c.b16 %v654, %v653
    %v664 = vsel %vm182, %v626, 0
    %666 = vmatpush.bf16.msra.mxu0 0
    %667 = vmatpush.bf16.msra.mxu0 0
    %668 = vmatpush.bf16.msra.mxu0 0
    %669 = vmatpush.bf16.msra.mxu0 0
    %670 = vmatpush.bf16.msra.mxu0 %v658
    %671 = vmatpush.bf16.msra.mxu0 %v657
    %672 = vmatpush.bf16.msra.mxu0 %v656
    %673 = vmatpush.bf16.msra.mxu0 %v655
    %674 = vmatmul.bf16.gmra.mxu0 %v664
    %v675 = vpop.f32.mrf.mxu0
    %v676 = vadd.f32 %v637, %v675
    %v677 = vpop.f32.mrf.mxu0
    %v678 = vadd.f32 %v637, %v677
    %679 = vdwg.mxu0
    %v680 = vmul.f32 %v676, 0.5
    %v681 = vmul.f32 %v678, 0.5
    %v682 = vmul.f32 %v676, 0.70710677
    %v683 = vmul.f32 %v678, 0.70710677
    %vm684 = vcmp.ge.f32.partialorder %v682, 0.0
    %vm685 = vcmp.ge.f32.partialorder %v683, 0.0
    %v686 = vsel %vm684, 1.0, -1.0
    %v687 = vsel %vm685, 1.0, -1.0
    %v688 = vand.u32 2147483647, %v682
    %v689 = vand.u32 2147483647, %v683
    %v690 = vmul.f32 %v688, 0.3275911
    %v691 = vmul.f32 %v689, 0.3275911
    %v692 = vadd.f32 %v690, 1.0
    %v693 = vadd.f32 %v691, 1.0
    %v694 = vrcp.pop %v692
    %v695 = vmul.f32 %v692, %v694
    %v696 = vsub.f32 1.0, %v695
    %v697 = vmul.f32 %v694, %v696
    %v698 = vadd.f32 %v694, %v697
    %vm699 = vweird.f32 %v692
    %vm700 = vweird.f32 %v694
    %vm701 = vmor %vm699, %vm700
    %v702 = vsel %vm701, %v694, %v698
    %v703 = vand.u32 2147483647, %v692
    %vm704 = vcmp.eq.f32.partialorder %v703, 8.507059e+37
    %v705 = vand.u32 %v692, 2147483648
    %v706 = vor.u32 1.1754944e-38, %v705
    %v707 = vsel %vm704, %v706, %v702
    %v708 = vmul.f32 1.0, %v707
    %v709 = vrcp.pop %v693
    %v710 = vmul.f32 %v693, %v709
    %v711 = vsub.f32 1.0, %v710
    %v712 = vmul.f32 %v709, %v711
    %v713 = vadd.f32 %v709, %v712
    %vm714 = vweird.f32 %v693
    %vm715 = vweird.f32 %v709
    %vm716 = vmor %vm714, %vm715
    %v717 = vsel %vm716, %v709, %v713
    %v718 = vand.u32 2147483647, %v693
    %vm719 = vcmp.eq.f32.partialorder %v718, 8.507059e+37
    %v720 = vand.u32 %v693, 2147483648
    %v721 = vor.u32 1.1754944e-38, %v720
    %v722 = vsel %vm719, %v721, %v717
    %v723 = vmul.f32 1.0, %v722
    %v724 = vmul.f32 %v708, 1.0614054
    %v725 = vmul.f32 %v723, 1.0614054
    %v726 = vadd.f32 %v724, -1.4531521
    %v727 = vadd.f32 %v725, -1.4531521
    %v728 = vmul.f32 %v726, %v708
    %v729 = vmul.f32 %v727, %v723
    %v730 = vadd.f32 %v728, 1.4214138
    %v731 = vadd.f32 %v729, 1.4214138
    %v732 = vmul.f32 %v730, %v708
    %v733 = vmul.f32 %v731, %v723
    %v734 = vadd.f32 %v732, -0.28449672
    %v735 = vadd.f32 %v733, -0.28449672
    %v736 = vmul.f32 %v734, %v708
    %v737 = vmul.f32 %v735, %v723
    %v738 = vadd.f32 %v736, 0.2548296
    %v739 = vadd.f32 %v737, 0.2548296
    %v740 = vmul.f32 %v738, %v708
    %v741 = vmul.f32 %v739, %v723
    %v742 = vsub.f32 0.0, %v688
    %v743 = vsub.f32 0.0, %v689
    %v744 = vmul.f32 %v742, %v688
    %v745 = vmul.f32 %v743, %v689
    %v746 = vmul.f32 %v744, 1.442695
    %v747 = vpow.pop %v746
    %v748 = vmul.f32 %v745, 1.442695
    %v749 = vpow.pop %v748
    %v750 = vmul.f32 %v740, %v747
    %v751 = vmul.f32 %v741, %v749
    %v752 = vsub.f32 1.0, %v750
    %v753 = vsub.f32 1.0, %v751
    %v754 = vmul.f32 %v686, %v752
    %v755 = vmul.f32 %v687, %v753
    %v756 = vadd.f32 %v754, 1.0
    %v757 = vadd.f32 %v755, 1.0
    %v758 = vmul.f32 %v680, %v756
    %v759 = vmul.f32 %v681, %v757
    %v760 = vpack.c.bf16 %v759, %v758
    %v761 = vld [vmem:[%s10] sm:$0xf]
    %v762 = vld [vmem:[%s10 + $0x4] sm:$0xf]
    %v763 = vld [vmem:[%s10 + $0x8] sm:$0xf]
    %v764 = vld [vmem:[%s10 + $0xc] sm:$0xf]
    %v765 = vld [vmem:[%s10 + $0x10] sm:$0xf]
    %v766 = vld [vmem:[%s10 + $0x14] sm:$0xf]
    %v767 = vld [vmem:[%s10 + $0x18] sm:$0xf]
    %v768 = vld [vmem:[%s10 + $0x1c] sm:$0xf]
    %v769 = vld [vmem:[%s10 + $0x20] sm:$0xf]
    %v770 = vld [vmem:[%s10 + $0x24] sm:$0xf]
    %v771 = vld [vmem:[%s10 + $0x28] sm:$0xf]
    %v772 = vld [vmem:[%s10 + $0x2c] sm:$0xf]
    %v773 = vld [vmem:[%s10 + $0x30] sm:$0xf]
    %v774 = vld [vmem:[%s10 + $0x34] sm:$0xf]
    %v775 = vld [vmem:[%s10 + $0x38] sm:$0xf]
    %v776 = vld [vmem:[%s10 + $0x3c] sm:$0xf]
    %v793 = vunpack.c.l.b16 %v761
    %v794 = vunpack.c.l.b16 %v762
    %v795 = vunpack.c.l.b16 %v763
    %v796 = vunpack.c.l.b16 %v764
    %v797 = vunpack.c.l.b16 %v765
    %v798 = vunpack.c.l.b16 %v766
    %v799 = vunpack.c.l.b16 %v767
    %v800 = vunpack.c.l.b16 %v768
    %v801 = vunpack.c.l.b16 %v769
    %v802 = vunpack.c.l.b16 %v770
    %v803 = vunpack.c.l.b16 %v771
    %v804 = vunpack.c.l.b16 %v772
    %v805 = vunpack.c.l.b16 %v773
    %v806 = vunpack.c.l.b16 %v774
    %v807 = vunpack.c.l.b16 %v775
    %v808 = vunpack.c.l.b16 %v776
    %v809 = vpack.c.b16 %v794, %v793
    %v810 = vpack.c.b16 %v796, %v795
    %v811 = vpack.c.b16 %v798, %v797
    %v812 = vpack.c.b16 %v800, %v799
    %v813 = vpack.c.b16 %v802, %v801
    %v814 = vpack.c.b16 %v804, %v803
    %v815 = vpack.c.b16 %v806, %v805
    %v816 = vpack.c.b16 %v808, %v807
    %825 = vmatpush.bf16.msra.mxu0 %v816
    %826 = vmatpush.bf16.msra.mxu0 %v815
    %827 = vmatpush.bf16.msra.mxu0 %v814
    %828 = vmatpush.bf16.msra.mxu0 %v813
    %829 = vmatpush.bf16.msra.mxu0 %v812
    %830 = vmatpush.bf16.msra.mxu0 %v811
    %831 = vmatpush.bf16.msra.mxu0 %v810
    %832 = vmatpush.bf16.msra.mxu0 %v809
    %833 = vmatmul.bf16.gmra.mxu0 %v760
    %v834 = vpop.f32.mrf.mxu0
    %v835 = vadd.f32 0.0, %v834
    %v836 = vpop.f32.mrf.mxu0
    %v837 = vadd.f32 0.0, %v836
    %838 = vdwg.mxu0
    %v839 = vadd.f32 %v574, %v835
    %v840 = vadd.f32 %v575, %v837
    %v841 = vld [vmem:[%s11] sm:$0x1]
    %v843 = vperm.slane %v841, 0
    %v845 = vadd.f32 %v839, %v843
    %v846 = vadd.f32 %v840, %v843
    %s847 = scalar_lea.vmem %s3, 4
    %v848 = vld [vmem:[%s847] sm:$0xf]
    %v849 = vsel %vm182, %v845, 0.0
    %850 = vadd.xlane.f32.xlu0 %v849
    %v851 = vpop.xlane.xlu0 %850
    %v852 = vsel %vm182, %v846, 0.0
    %853 = vadd.xlane.f32.xlu0 %v852
    %v854 = vpop.xlane.xlu0 %853
    %v855 = vmul.f32 %v851, %v241
    %v856 = vmul.f32 %v854, %v241
    %v857 = vsub.f32 %v845, %v855
    %v858 = vsub.f32 %v846, %v856
    %v859 = vmul.f32 %v857, %v857
    %v860 = vmul.f32 %v858, %v858
    %v861 = vsel %vm182, %v859, 0.0
    %862 = vadd.xlane.f32.xlu0 %v861
    %v863 = vpop.xlane.xlu0 %862
    %v864 = vsel %vm182, %v860, 0.0
    %865 = vadd.xlane.f32.xlu0 %v864
    %v866 = vpop.xlane.xlu0 %865
    %v867 = vmul.f32 %v863, %v241
    %v868 = vmul.f32 %v866, %v241
    %v869 = vadd.f32 %v867, 1e-12
    %v870 = vadd.f32 %v868, 1e-12
    %v871 = vrsqrt.pop %v869
    %v872 = vmul.f32 %v871, %v869
    %v873 = vmul.f32 %v872, %v871
    %v874 = vmul.f32 0.5, %v873
    %v875 = vsub.f32 1.5, %v874
    %v876 = vmul.f32 %v871, %v875
    %vm877 = vweird.f32 %v869
    %vm878 = vweird.f32 %v871
    %vm879 = vmor %vm877, %vm878
    %v880 = vsel %vm879, %v871, %v876
    %v881 = vrsqrt.pop %v870
    %v882 = vmul.f32 %v881, %v870
    %v883 = vmul.f32 %v882, %v881
    %v884 = vmul.f32 0.5, %v883
    %v885 = vsub.f32 1.5, %v884
    %v886 = vmul.f32 %v881, %v885
    %vm887 = vweird.f32 %v870
    %vm888 = vweird.f32 %v881
    %vm889 = vmor %vm887, %vm888
    %v890 = vsel %vm889, %v881, %v886
    %v891 = vmul.f32 %v857, %v880
    %v892 = vmul.f32 %v858, %v890
    %v893 = vperm.slane %v848, 0
    %v894 = vmul.f32 %v891, %v893
    %v895 = vmul.f32 %v892, %v893
    %v896 = vperm.slane %v848, 1
    %v897 = vadd.f32 %v894, %v896
    %v898 = vadd.f32 %v895, %v896
    %v899 = vpack.c.bf16 %v898, %v897
    %s900 = scalar_lea.vmem %s4, 64
    %v901 = vld [vmem:[%s900] sm:$0xff]
    %v902 = vld [vmem:[%s900 + $0x8] sm:$0xff]
    %v903 = vld [vmem:[%s900 + $0x10] sm:$0xff]
    %v904 = vld [vmem:[%s900 + $0x18] sm:$0xff]
    %v905 = vld [vmem:[%s900 + $0x20] sm:$0xff]
    %v906 = vld [vmem:[%s900 + $0x28] sm:$0xff]
    %v907 = vld [vmem:[%s900 + $0x30] sm:$0xff]
    %v908 = vld [vmem:[%s900 + $0x38] sm:$0xff]
    %s909 = scalar_lea.vmem %s5, 2
    %v910 = vld [vmem:[%s909] sm:$0x3]
    %v912 = vperm.slane %v910, 0
    %v913 = vperm.slane %v910, 1
    %v924 = vunpack.c.l.b16 %v901
    %v925 = vunpack.c.h.b16 %v901
    %v926 = vunpack.c.l.b16 %v902
    %v927 = vunpack.c.h.b16 %v902
    %v928 = vunpack.c.l.b16 %v903
    %v929 = vunpack.c.h.b16 %v903
    %v930 = vunpack.c.l.b16 %v904
    %v931 = vunpack.c.h.b16 %v904
    %v932 = vunpack.c.l.b16 %v905
    %v933 = vunpack.c.h.b16 %v905
    %v934 = vunpack.c.l.b16 %v906
    %v935 = vunpack.c.h.b16 %v906
    %v936 = vunpack.c.l.b16 %v907
    %v937 = vunpack.c.h.b16 %v907
    %v938 = vunpack.c.l.b16 %v908
    %v939 = vunpack.c.h.b16 %v908
    %v940 = vpack.c.b16 %v926, %v924
    %v941 = vpack.c.b16 %v927, %v925
    %v942 = vpack.c.b16 %v930, %v928
    %v943 = vpack.c.b16 %v931, %v929
    %v944 = vpack.c.b16 %v934, %v932
    %v945 = vpack.c.b16 %v935, %v933
    %v946 = vpack.c.b16 %v938, %v936
    %v947 = vpack.c.b16 %v939, %v937
    %v957 = vsel %vm182, %v899, 0
    %959 = vmatpush.bf16.msra.mxu0 0
    %960 = vmatpush.bf16.msra.mxu0 0
    %961 = vmatpush.bf16.msra.mxu0 0
    %962 = vmatpush.bf16.msra.mxu0 0
    %963 = vmatpush.bf16.msra.mxu0 %v946
    %964 = vmatpush.bf16.msra.mxu0 %v944
    %965 = vmatpush.bf16.msra.mxu0 %v942
    %966 = vmatpush.bf16.msra.mxu0 %v940
    %967 = vmatmul.bf16.gmra.mxu0 %v957
    %v968 = vpop.f32.mrf.mxu0
    %v969 = vadd.f32 %v912, %v968
    %v970 = vpop.f32.mrf.mxu0
    %v971 = vadd.f32 %v912, %v970
    %972 = vdwg.mxu0
    %973 = vmatpush.bf16.msra.mxu0 0
    %974 = vmatpush.bf16.msra.mxu0 0
    %975 = vmatpush.bf16.msra.mxu0 0
    %976 = vmatpush.bf16.msra.mxu0 0
    %977 = vmatpush.bf16.msra.mxu0 %v947
    %978 = vmatpush.bf16.msra.mxu0 %v945
    %979 = vmatpush.bf16.msra.mxu0 %v943
    %980 = vmatpush.bf16.msra.mxu0 %v941
    %981 = vmatmul.bf16.gmra.mxu0 %v957
    %v982 = vpop.f32.mrf.mxu0
    %v983 = vadd.f32 %v913, %v982
    %v984 = vpop.f32.mrf.mxu0
    %v985 = vadd.f32 %v913, %v984
    %986 = vdwg.mxu0
    %v987 = vmul.f32 %v969, %v381
    %v988 = vmul.f32 %v971, %v383
    %v989 = vmul.f32 %v969, %v385
    %v990 = vmul.f32 %v971, %v387
    %v991 = vmul.f32 %v969, %v389
    %v992 = vmul.f32 %v971, %v391
    %v993 = vmul.f32 %v969, %v393
    %v994 = vmul.f32 %v971, %v395
    %v995 = vpack.c.bf16 %v988, %v987
    %v996 = vpack.c.bf16 %v990, %v989
    %v997 = vpack.c.bf16 %v992, %v991
    %v998 = vpack.c.bf16 %v994, %v993
    %v999 = vmul.f32 %v983, %v216
    %v1000 = vmul.f32 %v985, %v217
    %v1001 = vmul.f32 %v983, %v218
    %v1002 = vmul.f32 %v985, %v219
    %v1003 = vmul.f32 %v983, %v220
    %v1004 = vmul.f32 %v985, %v221
    %v1005 = vmul.f32 %v983, %v222
    %v1006 = vmul.f32 %v985, %v223
    %v1007 = vpack.c.bf16 %v1000, %v999
    %v1008 = vpack.c.bf16 %v1002, %v1001
    %v1009 = vpack.c.bf16 %v1004, %v1003
    %v1010 = vpack.c.bf16 %v1006, %v1005
    %v1011 = vpack.c.bf16 %v971, %v969
    %1016 = vrot.lane.b32.xlu0 %v995, 64
    %v1017 = vpop.permute.xlu0 %1016
    %1018 = vrot.lane.b32.xlu0 %v996, 64
    %v1019 = vpop.permute.xlu0 %1018
    %1020 = vrot.lane.b32.xlu0 %v997, 64
    %v1021 = vpop.permute.xlu0 %1020
    %1022 = vrot.lane.b32.xlu0 %v998, 64
    %v1023 = vpop.permute.xlu0 %1022
    %v1025 = vsel %vm182, %v1011, 0
    %v1028 = vsel %vm182, %v1017, 0
    %v1031 = vsel %vm182, %v1019, 0
    %v1034 = vsel %vm182, %v1021, 0
    %v1037 = vsel %vm182, %v1023, 0
    %1039 = vmatpush.bf16.xpose.msra.mxu0 0
    %1040 = vmatpush.bf16.xpose.msra.mxu0 0
    %1041 = vmatpush.bf16.xpose.msra.mxu0 0
    %1042 = vmatpush.bf16.xpose.msra.mxu0 0
    %1043 = vmatpush.bf16.xpose.msra.mxu0 %v1037
    %1044 = vmatpush.bf16.xpose.msra.mxu0 %v1034
    %1045 = vmatpush.bf16.xpose.msra.mxu0 %v1031
    %1046 = vmatpush.bf16.xpose.msra.mxu0 %v1028
    %1047 = vmatmul.bf16.gmra.mxu0 %v1025
    %v1048 = vpop.f32.mrf.mxu0
    %v1049 = vadd.f32 %v214, %v1048
    %v1050 = vpop.f32.mrf.mxu0
    %v1051 = vadd.f32 %v215, %v1050
    %1052 = vdwg.mxu0
    %v1053 = vsel %vm182, %v1049, -inf
    %1054 = vmax.xlane.f32.xlu0 %v1053
    %v1055 = vpop.xlane.xlu0 %1054
    %v1056 = vsel %vm182, %v1051, -inf
    %1057 = vmax.xlane.f32.xlu0 %v1056
    %v1058 = vpop.xlane.xlu0 %1057
    %v1059 = vsub.f32 %v1049, %v1055
    %v1060 = vsub.f32 %v1051, %v1058
    %v1061 = vmul.f32 %v1059, 1.442695
    %v1062 = vpow.pop %v1061
    %v1063 = vmul.f32 %v1060, 1.442695
    %v1064 = vpow.pop %v1063
    %v1065 = vpack.c.bf16 %v1064, %v1062
    %v1067 = vsel %vm182, %v1065, 0
    %1069 = vmatpush.bf16.msra.mxu0 0
    %1070 = vmatpush.bf16.msra.mxu0 0
    %1071 = vmatpush.bf16.msra.mxu0 0
    %1072 = vmatpush.bf16.msra.mxu0 0
    %1073 = vmatpush.bf16.msra.mxu0 %v1010
    %1074 = vmatpush.bf16.msra.mxu0 %v1009
    %1075 = vmatpush.bf16.msra.mxu0 %v1008
    %1076 = vmatpush.bf16.msra.mxu0 %v1007
    %1077 = vmatmul.bf16.gmra.mxu0 %v1067
    %v1078 = vpop.f32.mrf.mxu0
    %v1079 = vadd.f32 0.0, %v1078
    %v1080 = vpop.f32.mrf.mxu0
    %v1081 = vadd.f32 0.0, %v1080
    %1082 = vdwg.mxu0
    %1083 = vmatpush.bf16.msra.mxu0 0
    %1084 = vmatpush.bf16.msra.mxu0 0
    %1085 = vmatpush.bf16.msra.mxu0 0
    %1086 = vmatpush.bf16.msra.mxu0 0
    %1087 = vmatpush.bf16.msra.mxu0 %v227
    %1088 = vmatpush.bf16.msra.mxu0 %v226
    %1089 = vmatpush.bf16.msra.mxu0 %v225
    %1090 = vmatpush.bf16.msra.mxu0 %v224
    %1091 = vmatmul.bf16.gmra.mxu0 %v1067
    %v1092 = vpop.f32.mrf.mxu0
    %v1093 = vadd.f32 0.0, %v1092
    %v1094 = vpop.f32.mrf.mxu0
    %v1095 = vadd.f32 0.0, %v1094
    %1096 = vdwg.mxu0
    %v1097 = vrcp.pop %v1093
    %v1098 = vrcp.pop %v1095
    %v1099 = vmul.f32 %v1079, %v1097
    %v1100 = vmul.f32 %v1081, %v1098
    %v1101 = vpack.c.bf16 %v1100, %v1099
    %s1102 = scalar_lea.vmem %s6, 32
    %v1103 = vld [vmem:[%s1102] sm:$0xf]
    %v1104 = vld [vmem:[%s1102 + $0x4] sm:$0xf]
    %v1105 = vld [vmem:[%s1102 + $0x8] sm:$0xf]
    %v1106 = vld [vmem:[%s1102 + $0xc] sm:$0xf]
    %v1107 = vld [vmem:[%s1102 + $0x10] sm:$0xf]
    %v1108 = vld [vmem:[%s1102 + $0x14] sm:$0xf]
    %v1109 = vld [vmem:[%s1102 + $0x18] sm:$0xf]
    %v1110 = vld [vmem:[%s1102 + $0x1c] sm:$0xf]
    %v1119 = vunpack.c.l.b16 %v1103
    %v1120 = vunpack.c.l.b16 %v1104
    %v1121 = vunpack.c.l.b16 %v1105
    %v1122 = vunpack.c.l.b16 %v1106
    %v1123 = vunpack.c.l.b16 %v1107
    %v1124 = vunpack.c.l.b16 %v1108
    %v1125 = vunpack.c.l.b16 %v1109
    %v1126 = vunpack.c.l.b16 %v1110
    %v1127 = vpack.c.b16 %v1120, %v1119
    %v1128 = vpack.c.b16 %v1122, %v1121
    %v1129 = vpack.c.b16 %v1124, %v1123
    %v1130 = vpack.c.b16 %v1126, %v1125
    %v1136 = vsel %vm182, %v1101, 0
    %1138 = vmatpush.bf16.msra.mxu0 0
    %1139 = vmatpush.bf16.msra.mxu0 0
    %1140 = vmatpush.bf16.msra.mxu0 0
    %1141 = vmatpush.bf16.msra.mxu0 0
    %1142 = vmatpush.bf16.msra.mxu0 %v1130
    %1143 = vmatpush.bf16.msra.mxu0 %v1129
    %1144 = vmatpush.bf16.msra.mxu0 %v1128
    %1145 = vmatpush.bf16.msra.mxu0 %v1127
    %1146 = vmatmul.bf16.gmra.mxu0 %v1136
    %v1147 = vpop.f32.mrf.mxu0
    %v1148 = vadd.f32 0.0, %v1147
    %v1149 = vpop.f32.mrf.mxu0
    %v1150 = vadd.f32 0.0, %v1149
    %1151 = vdwg.mxu0
    %v1152 = vadd.f32 %v845, %v1148
    %v1153 = vadd.f32 %v846, %v1150
    %s1154 = scalar_lea.vmem %s7, 1
    %v1155 = vld [vmem:[%s1154] sm:$0x1]
    %v1157 = vperm.slane %v1155, 0
    %v1159 = vadd.f32 %v1152, %v1157
    %v1160 = vadd.f32 %v1153, %v1157
    %v1161 = vsel %vm182, %v1159, 0.0
    %1162 = vadd.xlane.f32.xlu0 %v1161
    %v1163 = vpop.xlane.xlu0 %1162
    %v1164 = vsel %vm182, %v1160, 0.0
    %1165 = vadd.xlane.f32.xlu0 %v1164
    %v1166 = vpop.xlane.xlu0 %1165
    %v1167 = vmul.f32 %v1163, %v241
    %v1168 = vmul.f32 %v1166, %v241
    %v1169 = vsub.f32 %v1159, %v1167
    %v1170 = vsub.f32 %v1160, %v1168
    %v1171 = vmul.f32 %v1169, %v1169
    %v1172 = vmul.f32 %v1170, %v1170
    %v1173 = vsel %vm182, %v1171, 0.0
    %1174 = vadd.xlane.f32.xlu0 %v1173
    %v1175 = vpop.xlane.xlu0 %1174
    %v1176 = vsel %vm182, %v1172, 0.0
    %1177 = vadd.xlane.f32.xlu0 %v1176
    %v1178 = vpop.xlane.xlu0 %1177
    %v1179 = vmul.f32 %v1175, %v241
    %v1180 = vmul.f32 %v1178, %v241
    %v1181 = vadd.f32 %v1179, 1e-12
    %v1182 = vadd.f32 %v1180, 1e-12
    %v1183 = vrsqrt.pop %v1181
    %v1184 = vmul.f32 %v1183, %v1181
    %v1185 = vmul.f32 %v1184, %v1183
    %v1186 = vmul.f32 0.5, %v1185
    %v1187 = vsub.f32 1.5, %v1186
    %v1188 = vmul.f32 %v1183, %v1187
    %vm1189 = vweird.f32 %v1181
    %vm1190 = vweird.f32 %v1183
    %vm1191 = vmor %vm1189, %vm1190
    %v1192 = vsel %vm1191, %v1183, %v1188
    %v1193 = vrsqrt.pop %v1182
    %v1194 = vmul.f32 %v1193, %v1182
    %v1195 = vmul.f32 %v1194, %v1193
    %v1196 = vmul.f32 0.5, %v1195
    %v1197 = vsub.f32 1.5, %v1196
    %v1198 = vmul.f32 %v1193, %v1197
    %vm1199 = vweird.f32 %v1182
    %vm1200 = vweird.f32 %v1193
    %vm1201 = vmor %vm1199, %vm1200
    %v1202 = vsel %vm1201, %v1193, %v1198
    %v1203 = vmul.f32 %v1169, %v1192
    %v1204 = vmul.f32 %v1170, %v1202
    %v1205 = vperm.slane %v848, 2
    %v1206 = vmul.f32 %v1203, %v1205
    %v1207 = vmul.f32 %v1204, %v1205
    %v1208 = vperm.slane %v848, 3
    %v1209 = vadd.f32 %v1206, %v1208
    %v1210 = vadd.f32 %v1207, %v1208
    %v1211 = vpack.c.bf16 %v1210, %v1209
    %s1212 = scalar_lea.vmem %s8, 32
    %v1213 = vld [vmem:[%s1212] sm:$0xf]
    %v1214 = vld [vmem:[%s1212 + $0x4] sm:$0xf]
    %v1215 = vld [vmem:[%s1212 + $0x8] sm:$0xf]
    %v1216 = vld [vmem:[%s1212 + $0xc] sm:$0xf]
    %v1217 = vld [vmem:[%s1212 + $0x10] sm:$0xf]
    %v1218 = vld [vmem:[%s1212 + $0x14] sm:$0xf]
    %v1219 = vld [vmem:[%s1212 + $0x18] sm:$0xf]
    %v1220 = vld [vmem:[%s1212 + $0x1c] sm:$0xf]
    %s1221 = scalar_lea.vmem %s9, 1
    %v1222 = vld [vmem:[%s1221] sm:$0x1]
    %v1224 = vperm.slane %v1222, 0
    %v1234 = vunpack.c.l.b16 %v1213
    %v1235 = vunpack.c.l.b16 %v1214
    %v1236 = vunpack.c.l.b16 %v1215
    %v1237 = vunpack.c.l.b16 %v1216
    %v1238 = vunpack.c.l.b16 %v1217
    %v1239 = vunpack.c.l.b16 %v1218
    %v1240 = vunpack.c.l.b16 %v1219
    %v1241 = vunpack.c.l.b16 %v1220
    %v1242 = vpack.c.b16 %v1235, %v1234
    %v1243 = vpack.c.b16 %v1237, %v1236
    %v1244 = vpack.c.b16 %v1239, %v1238
    %v1245 = vpack.c.b16 %v1241, %v1240
    %v1251 = vsel %vm182, %v1211, 0
    %1253 = vmatpush.bf16.msra.mxu0 0
    %1254 = vmatpush.bf16.msra.mxu0 0
    %1255 = vmatpush.bf16.msra.mxu0 0
    %1256 = vmatpush.bf16.msra.mxu0 0
    %1257 = vmatpush.bf16.msra.mxu0 %v1245
    %1258 = vmatpush.bf16.msra.mxu0 %v1244
    %1259 = vmatpush.bf16.msra.mxu0 %v1243
    %1260 = vmatpush.bf16.msra.mxu0 %v1242
    %1261 = vmatmul.bf16.gmra.mxu0 %v1251
    %v1262 = vpop.f32.mrf.mxu0
    %v1263 = vadd.f32 %v1224, %v1262
    %v1264 = vpop.f32.mrf.mxu0
    %v1265 = vadd.f32 %v1224, %v1264
    %1266 = vdwg.mxu0
    %v1267 = vmul.f32 %v1263, 0.5
    %v1268 = vmul.f32 %v1265, 0.5
    %v1269 = vmul.f32 %v1263, 0.70710677
    %v1270 = vmul.f32 %v1265, 0.70710677
    %vm1271 = vcmp.ge.f32.partialorder %v1269, 0.0
    %vm1272 = vcmp.ge.f32.partialorder %v1270, 0.0
    %v1273 = vsel %vm1271, 1.0, -1.0
    %v1274 = vsel %vm1272, 1.0, -1.0
    %v1275 = vand.u32 2147483647, %v1269
    %v1276 = vand.u32 2147483647, %v1270
    %v1277 = vmul.f32 %v1275, 0.3275911
    %v1278 = vmul.f32 %v1276, 0.3275911
    %v1279 = vadd.f32 %v1277, 1.0
    %v1280 = vadd.f32 %v1278, 1.0
    %v1281 = vrcp.pop %v1279
    %v1282 = vmul.f32 %v1279, %v1281
    %v1283 = vsub.f32 1.0, %v1282
    %v1284 = vmul.f32 %v1281, %v1283
    %v1285 = vadd.f32 %v1281, %v1284
    %vm1286 = vweird.f32 %v1279
    %vm1287 = vweird.f32 %v1281
    %vm1288 = vmor %vm1286, %vm1287
    %v1289 = vsel %vm1288, %v1281, %v1285
    %v1290 = vand.u32 2147483647, %v1279
    %vm1291 = vcmp.eq.f32.partialorder %v1290, 8.507059e+37
    %v1292 = vand.u32 %v1279, 2147483648
    %v1293 = vor.u32 1.1754944e-38, %v1292
    %v1294 = vsel %vm1291, %v1293, %v1289
    %v1295 = vmul.f32 1.0, %v1294
    %v1296 = vrcp.pop %v1280
    %v1297 = vmul.f32 %v1280, %v1296
    %v1298 = vsub.f32 1.0, %v1297
    %v1299 = vmul.f32 %v1296, %v1298
    %v1300 = vadd.f32 %v1296, %v1299
    %vm1301 = vweird.f32 %v1280
    %vm1302 = vweird.f32 %v1296
    %vm1303 = vmor %vm1301, %vm1302
    %v1304 = vsel %vm1303, %v1296, %v1300
    %v1305 = vand.u32 2147483647, %v1280
    %vm1306 = vcmp.eq.f32.partialorder %v1305, 8.507059e+37
    %v1307 = vand.u32 %v1280, 2147483648
    %v1308 = vor.u32 1.1754944e-38, %v1307
    %v1309 = vsel %vm1306, %v1308, %v1304
    %v1310 = vmul.f32 1.0, %v1309
    %v1311 = vmul.f32 %v1295, 1.0614054
    %v1312 = vmul.f32 %v1310, 1.0614054
    %v1313 = vadd.f32 %v1311, -1.4531521
    %v1314 = vadd.f32 %v1312, -1.4531521
    %v1315 = vmul.f32 %v1313, %v1295
    %v1316 = vmul.f32 %v1314, %v1310
    %v1317 = vadd.f32 %v1315, 1.4214138
    %v1318 = vadd.f32 %v1316, 1.4214138
    %v1319 = vmul.f32 %v1317, %v1295
    %v1320 = vmul.f32 %v1318, %v1310
    %v1321 = vadd.f32 %v1319, -0.28449672
    %v1322 = vadd.f32 %v1320, -0.28449672
    %v1323 = vmul.f32 %v1321, %v1295
    %v1324 = vmul.f32 %v1322, %v1310
    %v1325 = vadd.f32 %v1323, 0.2548296
    %v1326 = vadd.f32 %v1324, 0.2548296
    %v1327 = vmul.f32 %v1325, %v1295
    %v1328 = vmul.f32 %v1326, %v1310
    %v1329 = vsub.f32 0.0, %v1275
    %v1330 = vsub.f32 0.0, %v1276
    %v1331 = vmul.f32 %v1329, %v1275
    %v1332 = vmul.f32 %v1330, %v1276
    %v1333 = vmul.f32 %v1331, 1.442695
    %v1334 = vpow.pop %v1333
    %v1335 = vmul.f32 %v1332, 1.442695
    %v1336 = vpow.pop %v1335
    %v1337 = vmul.f32 %v1327, %v1334
    %v1338 = vmul.f32 %v1328, %v1336
    %v1339 = vsub.f32 1.0, %v1337
    %v1340 = vsub.f32 1.0, %v1338
    %v1341 = vmul.f32 %v1273, %v1339
    %v1342 = vmul.f32 %v1274, %v1340
    %v1343 = vadd.f32 %v1341, 1.0
    %v1344 = vadd.f32 %v1342, 1.0
    %v1345 = vmul.f32 %v1267, %v1343
    %v1346 = vmul.f32 %v1268, %v1344
    %v1347 = vpack.c.bf16 %v1346, %v1345
    %s1348 = scalar_lea.vmem %s10, 64
    %v1349 = vld [vmem:[%s1348] sm:$0xf]
    %v1350 = vld [vmem:[%s1348 + $0x4] sm:$0xf]
    %v1351 = vld [vmem:[%s1348 + $0x8] sm:$0xf]
    %v1352 = vld [vmem:[%s1348 + $0xc] sm:$0xf]
    %v1353 = vld [vmem:[%s1348 + $0x10] sm:$0xf]
    %v1354 = vld [vmem:[%s1348 + $0x14] sm:$0xf]
    %v1355 = vld [vmem:[%s1348 + $0x18] sm:$0xf]
    %v1356 = vld [vmem:[%s1348 + $0x1c] sm:$0xf]
    %v1357 = vld [vmem:[%s1348 + $0x20] sm:$0xf]
    %v1358 = vld [vmem:[%s1348 + $0x24] sm:$0xf]
    %v1359 = vld [vmem:[%s1348 + $0x28] sm:$0xf]
    %v1360 = vld [vmem:[%s1348 + $0x2c] sm:$0xf]
    %v1361 = vld [vmem:[%s1348 + $0x30] sm:$0xf]
    %v1362 = vld [vmem:[%s1348 + $0x34] sm:$0xf]
    %v1363 = vld [vmem:[%s1348 + $0x38] sm:$0xf]
    %v1364 = vld [vmem:[%s1348 + $0x3c] sm:$0xf]
    %v1381 = vunpack.c.l.b16 %v1349
    %v1382 = vunpack.c.l.b16 %v1350
    %v1383 = vunpack.c.l.b16 %v1351
    %v1384 = vunpack.c.l.b16 %v1352
    %v1385 = vunpack.c.l.b16 %v1353
    %v1386 = vunpack.c.l.b16 %v1354
    %v1387 = vunpack.c.l.b16 %v1355
    %v1388 = vunpack.c.l.b16 %v1356
    %v1389 = vunpack.c.l.b16 %v1357
    %v1390 = vunpack.c.l.b16 %v1358
    %v1391 = vunpack.c.l.b16 %v1359
    %v1392 = vunpack.c.l.b16 %v1360
    %v1393 = vunpack.c.l.b16 %v1361
    %v1394 = vunpack.c.l.b16 %v1362
    %v1395 = vunpack.c.l.b16 %v1363
    %v1396 = vunpack.c.l.b16 %v1364
    %v1397 = vpack.c.b16 %v1382, %v1381
    %v1398 = vpack.c.b16 %v1384, %v1383
    %v1399 = vpack.c.b16 %v1386, %v1385
    %v1400 = vpack.c.b16 %v1388, %v1387
    %v1401 = vpack.c.b16 %v1390, %v1389
    %v1402 = vpack.c.b16 %v1392, %v1391
    %v1403 = vpack.c.b16 %v1394, %v1393
    %v1404 = vpack.c.b16 %v1396, %v1395
    %1413 = vmatpush.bf16.msra.mxu0 %v1404
    %1414 = vmatpush.bf16.msra.mxu0 %v1403
    %1415 = vmatpush.bf16.msra.mxu0 %v1402
    %1416 = vmatpush.bf16.msra.mxu0 %v1401
    %1417 = vmatpush.bf16.msra.mxu0 %v1400
    %1418 = vmatpush.bf16.msra.mxu0 %v1399
    %1419 = vmatpush.bf16.msra.mxu0 %v1398
    %1420 = vmatpush.bf16.msra.mxu0 %v1397
    %1421 = vmatmul.bf16.gmra.mxu0 %v1347
    %v1422 = vpop.f32.mrf.mxu0
    %v1423 = vadd.f32 0.0, %v1422
    %v1424 = vpop.f32.mrf.mxu0
    %v1425 = vadd.f32 0.0, %v1424
    %1426 = vdwg.mxu0
    %v1427 = vadd.f32 %v1159, %v1423
    %v1428 = vadd.f32 %v1160, %v1425
    %s1429 = scalar_lea.vmem %s11, 1
    %v1430 = vld [vmem:[%s1429] sm:$0x1]
    %v1432 = vperm.slane %v1430, 0
    %v1434 = vadd.f32 %v1427, %v1432
    %v1435 = vadd.f32 %v1428, %v1432
    %v1436 = vpack.c.bf16 %v1434, %v1434
    %v1437 = vpack.c.bf16 %v1435, %v1435
    %v1438 = vld [vmem:[%s14] sm:$0xff]
    %v1439 = vld [vmem:[%s14 + $0x8] sm:$0xff]
    %v1440 = vld [vmem:[%s14 + $0x10] sm:$0xff]
    %v1441 = vld [vmem:[%s14 + $0x18] sm:$0xff]
    %v1442 = vld [vmem:[%s14 + $0x20] sm:$0xff]
    %v1443 = vld [vmem:[%s14 + $0x28] sm:$0xff]
    %v1444 = vld [vmem:[%s14 + $0x30] sm:$0xff]
    %v1445 = vld [vmem:[%s14 + $0x38] sm:$0xff]
    %v1446 = vld [vmem:[%s15] sm:$0x3]
    %v1448 = vperm.slane %v1446, 0
    %v1449 = vperm.slane %v1446, 1
    %v1454 = vunpack.c.l.b16 %v1436
    %v1455 = vunpack.c.l.b16 %v1437
    %v1456 = vrot.slane %v1455, 7
    %vm1457 = vcmask 1041409
    %v1458 = vsel %vm1457, %v1456, %v1454
    %v1459 = vpack.c.b16 %v1458, %v1458
    %v1468 = vunpack.c.l.b16 %v1438
    %v1469 = vunpack.c.h.b16 %v1438
    %v1470 = vunpack.c.l.b16 %v1439
    %v1471 = vunpack.c.h.b16 %v1439
    %v1472 = vunpack.c.l.b16 %v1440
    %v1473 = vunpack.c.h.b16 %v1440
    %v1474 = vunpack.c.l.b16 %v1441
    %v1475 = vunpack.c.h.b16 %v1441
    %v1476 = vunpack.c.l.b16 %v1442
    %v1477 = vunpack.c.h.b16 %v1442
    %v1478 = vunpack.c.l.b16 %v1443
    %v1479 = vunpack.c.h.b16 %v1443
    %v1480 = vunpack.c.l.b16 %v1444
    %v1481 = vunpack.c.h.b16 %v1444
    %v1482 = vunpack.c.l.b16 %v1445
    %v1483 = vunpack.c.h.b16 %v1445
    %v1484 = vpack.c.b16 %v1470, %v1468
    %v1485 = vpack.c.b16 %v1471, %v1469
    %v1486 = vpack.c.b16 %v1474, %v1472
    %v1487 = vpack.c.b16 %v1475, %v1473
    %v1488 = vpack.c.b16 %v1478, %v1476
    %v1489 = vpack.c.b16 %v1479, %v1477
    %v1490 = vpack.c.b16 %v1482, %v1480
    %v1491 = vpack.c.b16 %v1483, %v1481
    %v1501 = vsel %vm182, %v1459, 0
    %1503 = vmatpush.bf16.msra.mxu0 0
    %1504 = vmatpush.bf16.msra.mxu0 0
    %1505 = vmatpush.bf16.msra.mxu0 0
    %1506 = vmatpush.bf16.msra.mxu0 0
    %1507 = vmatpush.bf16.msra.mxu0 %v1490
    %1508 = vmatpush.bf16.msra.mxu0 %v1488
    %1509 = vmatpush.bf16.msra.mxu0 %v1486
    %1510 = vmatpush.bf16.msra.mxu0 %v1484
    %1511 = vmatmul.bf16.gmra.mxu0 %v1501
    %v1512 = vpop.f32.mrf.mxu0
    %v1513 = vadd.f32 %v1448, %v1512
    %v1514 = vpop.f32.mrf.mxu0
    %1515 = vdwg.mxu0
    %1516 = vmatpush.bf16.msra.mxu0 0
    %1517 = vmatpush.bf16.msra.mxu0 0
    %1518 = vmatpush.bf16.msra.mxu0 0
    %1519 = vmatpush.bf16.msra.mxu0 0
    %1520 = vmatpush.bf16.msra.mxu0 %v1491
    %1521 = vmatpush.bf16.msra.mxu0 %v1489
    %1522 = vmatpush.bf16.msra.mxu0 %v1487
    %1523 = vmatpush.bf16.msra.mxu0 %v1485
    %1524 = vmatmul.bf16.gmra.mxu0 %v1501
    %v1525 = vpop.f32.mrf.mxu0
    %v1526 = vadd.f32 %v1449, %v1525
    %v1527 = vpop.f32.mrf.mxu0
    %1528 = vdwg.mxu0
    %v1529 = vmax.f32 %v1513, 0.0
    %v1530 = vmax.f32 %v1526, 0.0
    %v1531 = vpack.c.bf16 %v1529, %v1529
    %v1532 = vpack.c.bf16 %v1530, %v1530
    %v1533 = vld [vmem:[%s16] sm:$0xf]
    %v1534 = vld [vmem:[%s16 + $0x4] sm:$0xf]
    %v1535 = vld [vmem:[%s16 + $0x8] sm:$0xf]
    %v1536 = vld [vmem:[%s16 + $0xc] sm:$0xf]
    %v1537 = vld [vmem:[%s16 + $0x10] sm:$0xf]
    %v1538 = vld [vmem:[%s16 + $0x14] sm:$0xf]
    %v1539 = vld [vmem:[%s16 + $0x18] sm:$0xf]
    %v1540 = vld [vmem:[%s16 + $0x1c] sm:$0xf]
    %v1541 = vld [vmem:[%s16 + $0x20] sm:$0xf]
    %v1542 = vld [vmem:[%s16 + $0x24] sm:$0xf]
    %v1543 = vld [vmem:[%s16 + $0x28] sm:$0xf]
    %v1544 = vld [vmem:[%s16 + $0x2c] sm:$0xf]
    %v1545 = vld [vmem:[%s16 + $0x30] sm:$0xf]
    %v1546 = vld [vmem:[%s16 + $0x34] sm:$0xf]
    %v1547 = vld [vmem:[%s16 + $0x38] sm:$0xf]
    %v1548 = vld [vmem:[%s16 + $0x3c] sm:$0xf]
    %v1549 = vld [vmem:[%s16 + $0x40] sm:$0xf]
    %v1550 = vld [vmem:[%s16 + $0x44] sm:$0xf]
    %v1551 = vld [vmem:[%s16 + $0x48] sm:$0xf]
    %v1552 = vld [vmem:[%s16 + $0x4c] sm:$0xf]
    %v1553 = vld [vmem:[%s16 + $0x50] sm:$0xf]
    %v1554 = vld [vmem:[%s16 + $0x54] sm:$0xf]
    %v1555 = vld [vmem:[%s16 + $0x58] sm:$0xf]
    %v1556 = vld [vmem:[%s16 + $0x5c] sm:$0xf]
    %v1557 = vld [vmem:[%s16 + $0x60] sm:$0xf]
    %v1558 = vld [vmem:[%s16 + $0x64] sm:$0xf]
    %v1559 = vld [vmem:[%s16 + $0x68] sm:$0xf]
    %v1560 = vld [vmem:[%s16 + $0x6c] sm:$0xf]
    %v1561 = vld [vmem:[%s16 + $0x70] sm:$0xf]
    %v1562 = vld [vmem:[%s16 + $0x74] sm:$0xf]
    %v1563 = vld [vmem:[%s16 + $0x78] sm:$0xf]
    %v1564 = vld [vmem:[%s16 + $0x7c] sm:$0xf]
    %v1565 = vld [vmem:[%s17] sm:$0x1]
    %v1567 = vperm.slane %v1565, 0
    %v1601 = vunpack.c.l.b16 %v1533
    %v1602 = vunpack.c.l.b16 %v1534
    %v1603 = vunpack.c.l.b16 %v1535
    %v1604 = vunpack.c.l.b16 %v1536
    %v1605 = vunpack.c.l.b16 %v1537
    %v1606 = vunpack.c.l.b16 %v1538
    %v1607 = vunpack.c.l.b16 %v1539
    %v1608 = vunpack.c.l.b16 %v1540
    %v1609 = vunpack.c.l.b16 %v1541
    %v1610 = vunpack.c.l.b16 %v1542
    %v1611 = vunpack.c.l.b16 %v1543
    %v1612 = vunpack.c.l.b16 %v1544
    %v1613 = vunpack.c.l.b16 %v1545
    %v1614 = vunpack.c.l.b16 %v1546
    %v1615 = vunpack.c.l.b16 %v1547
    %v1616 = vunpack.c.l.b16 %v1548
    %v1617 = vunpack.c.l.b16 %v1549
    %v1618 = vunpack.c.l.b16 %v1550
    %v1619 = vunpack.c.l.b16 %v1551
    %v1620 = vunpack.c.l.b16 %v1552
    %v1621 = vunpack.c.l.b16 %v1553
    %v1622 = vunpack.c.l.b16 %v1554
    %v1623 = vunpack.c.l.b16 %v1555
    %v1624 = vunpack.c.l.b16 %v1556
    %v1625 = vunpack.c.l.b16 %v1557
    %v1626 = vunpack.c.l.b16 %v1558
    %v1627 = vunpack.c.l.b16 %v1559
    %v1628 = vunpack.c.l.b16 %v1560
    %v1629 = vunpack.c.l.b16 %v1561
    %v1630 = vunpack.c.l.b16 %v1562
    %v1631 = vunpack.c.l.b16 %v1563
    %v1632 = vunpack.c.l.b16 %v1564
    %v1633 = vpack.c.b16 %v1602, %v1601
    %v1634 = vpack.c.b16 %v1604, %v1603
    %v1635 = vpack.c.b16 %v1606, %v1605
    %v1636 = vpack.c.b16 %v1608, %v1607
    %v1637 = vpack.c.b16 %v1610, %v1609
    %v1638 = vpack.c.b16 %v1612, %v1611
    %v1639 = vpack.c.b16 %v1614, %v1613
    %v1640 = vpack.c.b16 %v1616, %v1615
    %v1641 = vpack.c.b16 %v1618, %v1617
    %v1642 = vpack.c.b16 %v1620, %v1619
    %v1643 = vpack.c.b16 %v1622, %v1621
    %v1644 = vpack.c.b16 %v1624, %v1623
    %v1645 = vpack.c.b16 %v1626, %v1625
    %v1646 = vpack.c.b16 %v1628, %v1627
    %v1647 = vpack.c.b16 %v1630, %v1629
    %v1648 = vpack.c.b16 %v1632, %v1631
    %1665 = vmatpush.bf16.msra.mxu0 %v1640
    %1666 = vmatpush.bf16.msra.mxu0 %v1639
    %1667 = vmatpush.bf16.msra.mxu0 %v1638
    %1668 = vmatpush.bf16.msra.mxu0 %v1637
    %1669 = vmatpush.bf16.msra.mxu0 %v1636
    %1670 = vmatpush.bf16.msra.mxu0 %v1635
    %1671 = vmatpush.bf16.msra.mxu0 %v1634
    %1672 = vmatpush.bf16.msra.mxu0 %v1633
    %1673 = vmatmul.bf16.gmra.mxu0 %v1531
    %v1674 = vpop.f32.mrf.mxu0
    %v1675 = vadd.f32 %v1567, %v1674
    %v1676 = vpop.f32.mrf.mxu0
    %1677 = vdwg.mxu0
    %1678 = vmatpush.bf16.msra.mxu0 %v1648
    %1679 = vmatpush.bf16.msra.mxu0 %v1647
    %1680 = vmatpush.bf16.msra.mxu0 %v1646
    %1681 = vmatpush.bf16.msra.mxu0 %v1645
    %1682 = vmatpush.bf16.msra.mxu0 %v1644
    %1683 = vmatpush.bf16.msra.mxu0 %v1643
    %1684 = vmatpush.bf16.msra.mxu0 %v1642
    %1685 = vmatpush.bf16.msra.mxu0 %v1641
    %1686 = vmatmul.bf16.gmra.mxu0 %v1532
    %v1687 = vpop.f32.mrf.mxu0
    %v1688 = vadd.f32 %v1675, %v1687
    %v1689 = vpop.f32.mrf.mxu0
    %1690 = vdwg.mxu0
    %v1691 = vmax.f32 %v1688, 0.0
    %v1692 = vpack.c.bf16 %v1691, %v1691
    %v1693 = vld [vmem:[%s18] sm:$0xf]
    %v1694 = vld [vmem:[%s18 + $0x4] sm:$0xf]
    %v1695 = vld [vmem:[%s18 + $0x8] sm:$0xf]
    %v1696 = vld [vmem:[%s18 + $0xc] sm:$0xf]
    %v1697 = vld [vmem:[%s18 + $0x10] sm:$0xf]
    %v1698 = vld [vmem:[%s18 + $0x14] sm:$0xf]
    %v1699 = vld [vmem:[%s18 + $0x18] sm:$0xf]
    %v1700 = vld [vmem:[%s18 + $0x1c] sm:$0xf]
    %v1701 = vld [vmem:[%s18 + $0x20] sm:$0xf]
    %v1702 = vld [vmem:[%s18 + $0x24] sm:$0xf]
    %v1703 = vld [vmem:[%s18 + $0x28] sm:$0xf]
    %v1704 = vld [vmem:[%s18 + $0x2c] sm:$0xf]
    %v1705 = vld [vmem:[%s18 + $0x30] sm:$0xf]
    %v1706 = vld [vmem:[%s18 + $0x34] sm:$0xf]
    %v1707 = vld [vmem:[%s18 + $0x38] sm:$0xf]
    %v1708 = vld [vmem:[%s18 + $0x3c] sm:$0xf]
    %v1709 = vld [vmem:[%s19] sm:$0x1]
    %v1711 = vperm.slane %v1709, 0
    %v1729 = vunpack.c.l.b16 %v1693
    %v1730 = vunpack.c.l.b16 %v1694
    %v1731 = vunpack.c.l.b16 %v1695
    %v1732 = vunpack.c.l.b16 %v1696
    %v1733 = vunpack.c.l.b16 %v1697
    %v1734 = vunpack.c.l.b16 %v1698
    %v1735 = vunpack.c.l.b16 %v1699
    %v1736 = vunpack.c.l.b16 %v1700
    %v1737 = vunpack.c.l.b16 %v1701
    %v1738 = vunpack.c.l.b16 %v1702
    %v1739 = vunpack.c.l.b16 %v1703
    %v1740 = vunpack.c.l.b16 %v1704
    %v1741 = vunpack.c.l.b16 %v1705
    %v1742 = vunpack.c.l.b16 %v1706
    %v1743 = vunpack.c.l.b16 %v1707
    %v1744 = vunpack.c.l.b16 %v1708
    %v1745 = vpack.c.b16 %v1730, %v1729
    %v1746 = vpack.c.b16 %v1732, %v1731
    %v1747 = vpack.c.b16 %v1734, %v1733
    %v1748 = vpack.c.b16 %v1736, %v1735
    %v1749 = vpack.c.b16 %v1738, %v1737
    %v1750 = vpack.c.b16 %v1740, %v1739
    %v1751 = vpack.c.b16 %v1742, %v1741
    %v1752 = vpack.c.b16 %v1744, %v1743
    %1761 = vmatpush.bf16.msra.mxu0 %v1752
    %1762 = vmatpush.bf16.msra.mxu0 %v1751
    %1763 = vmatpush.bf16.msra.mxu0 %v1750
    %1764 = vmatpush.bf16.msra.mxu0 %v1749
    %1765 = vmatpush.bf16.msra.mxu0 %v1748
    %1766 = vmatpush.bf16.msra.mxu0 %v1747
    %1767 = vmatpush.bf16.msra.mxu0 %v1746
    %1768 = vmatpush.bf16.msra.mxu0 %v1745
    %1769 = vmatmul.bf16.gmra.mxu0 %v1692
    %v1770 = vpop.f32.mrf.mxu0
    %v1771 = vadd.f32 %v1711, %v1770
    %v1772 = vpop.f32.mrf.mxu0
    %1773 = vdwg.mxu0
    %v1774 = vmax.f32 %v1771, 0.0
    %v1775 = vpack.c.bf16 %v1774, %v1774
    %v1776 = vld [vmem:[%s20] sm:$0xf]
    %v1777 = vld [vmem:[%s20 + $0x4] sm:$0xf]
    %v1778 = vld [vmem:[%s20 + $0x8] sm:$0xf]
    %v1779 = vld [vmem:[%s20 + $0xc] sm:$0xf]
    %v1780 = vld [vmem:[%s20 + $0x10] sm:$0xf]
    %v1781 = vld [vmem:[%s20 + $0x14] sm:$0xf]
    %v1782 = vld [vmem:[%s20 + $0x18] sm:$0xf]
    %v1783 = vld [vmem:[%s20 + $0x1c] sm:$0xf]
    %v1784 = vld [vmem:[%s21] sm:$0x1]
    %v1786 = vperm.slane %v1784, 0
    %v1796 = vunpack.c.l.b16 %v1776
    %v1797 = vunpack.c.l.b16 %v1777
    %v1798 = vunpack.c.l.b16 %v1778
    %v1799 = vunpack.c.l.b16 %v1779
    %v1800 = vunpack.c.l.b16 %v1780
    %v1801 = vunpack.c.l.b16 %v1781
    %v1802 = vunpack.c.l.b16 %v1782
    %v1803 = vunpack.c.l.b16 %v1783
    %v1804 = vpack.c.b16 %v1797, %v1796
    %v1805 = vpack.c.b16 %v1799, %v1798
    %v1806 = vpack.c.b16 %v1801, %v1800
    %v1807 = vpack.c.b16 %v1803, %v1802
    %v1813 = vsel %vm182, %v1775, 0
    %1815 = vmatpush.bf16.msra.mxu0 0
    %1816 = vmatpush.bf16.msra.mxu0 0
    %1817 = vmatpush.bf16.msra.mxu0 0
    %1818 = vmatpush.bf16.msra.mxu0 0
    %1819 = vmatpush.bf16.msra.mxu0 %v1807
    %1820 = vmatpush.bf16.msra.mxu0 %v1806
    %1821 = vmatpush.bf16.msra.mxu0 %v1805
    %1822 = vmatpush.bf16.msra.mxu0 %v1804
    %1823 = vmatmul.bf16.gmra.mxu0 %v1813
    %v1824 = vpop.f32.mrf.mxu0
    %v1825 = vadd.f32 %v1786, %v1824
    %v1826 = vpop.f32.mrf.mxu0
    %1827 = vdwg.mxu0
    %vm1828 = vcmask 9216
    %1829 = vst.msk [vmem:[#allocation2] sm:$0x3] %vm1828, %v1825
    // Predicated region
    $region90: #{multimodel_forward.1} parent=1 // pred_check
      _
    $region91: #{multimodel_forward.1} parent=1 // pred_check_branch
      %1831 = sbr.rel (0) target = $region93
    $region92: #{multimodel_forward.1} parent=1 // pred_region
      %1833 = vsyncadd [#allocation3], 0
      %s1835 = sshll.u32 [#allocation2], 4
      %s1836 = int_to_ptr.vmem [resolvable:$true] %s1835
      %s1837 = sshll.u32 %s22, 4
      %s1838 = int_to_ptr.hbm [resolvable:$true] %s1837
      %1840 = dma.vmem_to_hbm [thread:$0]  %s1836, 32, %s1838, [#allocation3]
    $region93: #{multimodel_forward.1} parent=1 // pred_fallthru
      _
    // Predicated region
    $region94: #{multimodel_forward.1} parent=1 // pred_check
      _
    $region95: #{multimodel_forward.1} parent=1 // pred_check_branch
      %1842 = sbr.rel (0) target = $region97
    $region96: #{multimodel_forward.1} parent=1 // pred_region
      %1844 = dma.done [#allocation3], 32
    $region97: #{multimodel_forward.1} parent=1 // pred_fallthru
      _
    %1845 = vsyncpa [#allocation3], 1

</llo_original>
